<compile_context>
chip_gen: v5e
topology: v5e:2x2
jax: 0.10.0
libtpu: 0.0.40
codegen_flags: <defaults>
</compile_context>

<pallas_src>
import math

import numpy as np
import jax
import jax.numpy as jnp
from jax.experimental import pallas as pl
from jax.experimental.pallas import tpu as pltpu

# ----------------------- config (stand-in for args / config) -----------------------
BATCH = 2                 # args.train_batch_size
MAX_SENT_LEN = 8          # args.max_sent_len   -> input channels of the TCNs
HIDDEN = 32               # config.hidden_size  -> conv "length" and attention hidden
NUM_CHANNELS = (16, 16)   # args.num_channels
TAGSET = 4                # len(args.rel2label)
KSIZE = 2                 # TCN kernel_size (locuslab default)

F32 = jnp.float32
BF16 = jnp.bfloat16

SLAB_WIDTH = 128          # lane-aligned parameter slab
ROW_ALIGN = 16            # bf16 sublane packing -> 16-row aligned item offsets
NEG_INF = -1e9


# ============================== static slab layout ==================================
def make_layout():
    """Static placement (row_offset, rows, cols) of every packed operand."""
    B, S1 = BATCH, NUM_CHANNELS[-1]
    items = []
    for i in range(len(NUM_CHANNELS)):
        items.append((f"shift{i}", HIDDEN, HIDDEN))          # (L, L) causal shift
    items.append(("mask_s", B * S1, B * S1))                 # self-att batch mask
    items.append(("mask_d", 2 * B * S1, 2 * B * S1))         # dot-att batch mask
    for tag in ("c1", "c2"):
        c_in = MAX_SENT_LEN
        for i, c_out in enumerate(NUM_CHANNELS):
            items += [(f"{tag}b{i}_wc1", B * c_out, B * c_in),
                      (f"{tag}b{i}_wp1", B * c_out, B * c_in),
                      (f"{tag}b{i}_b1",  B * c_out, 1),
                      (f"{tag}b{i}_wc2", B * c_out, B * c_out),
                      (f"{tag}b{i}_wp2", B * c_out, B * c_out),
                      (f"{tag}b{i}_b2",  B * c_out, 1)]
            if c_in != c_out:
                items += [(f"{tag}b{i}_wd", B * c_out, B * c_in),
                          (f"{tag}b{i}_bd", B * c_out, 1)]
            c_in = c_out
    for tag in ("a1", "a2", "ad"):
        items += [(f"{tag}_wq", HIDDEN, HIDDEN), (f"{tag}_wk", HIDDEN, HIDDEN),
                  (f"{tag}_wv", HIDDEN, HIDDEN),
                  (f"{tag}_bq", 1, HIDDEN), (f"{tag}_bk", 1, HIDDEN),
                  (f"{tag}_bv", 1, HIDDEN)]
    items += [("wl", HIDDEN, 1), ("bl", 1, 1),
              ("w_head", B * TAGSET, 2 * B * S1), ("b_head", B * TAGSET, 1)]

    layout, row = {}, 0
    for name, r, c in items:
        layout[name] = (row, r, c)
        row += ((r + ROW_ALIGN - 1) // ROW_ALIGN) * ROW_ALIGN
    return layout, row


LAYOUT, SLAB_ROWS = make_layout()


# ============================ host-side slab packing ================================
def _shift_matrix(L, d):
    # (h @ S)[:, t] = h[:, t - d] for t >= d, 0 otherwise (causal zero padding).
    j = np.arange(L)[:, None]
    t = np.arange(L)[None, :]
    return ((j == (t - d)) & (t >= d)).astype(np.float32)


def _batch_mask(group_ids):
    eq = group_ids[:, None] == group_ids[None, :]
    return np.where(eq, 0.0, NEG_INF).astype(np.float32)


def _blockdiag(w):
    w = np.asarray(w, np.float32)
    co, ci = w.shape
    out = np.zeros((BATCH * co, BATCH * ci), np.float32)
    for b in range(BATCH):
        out[b * co:(b + 1) * co, b * ci:(b + 1) * ci] = w
    return out


def _stack_bias(b):
    return np.tile(np.asarray(b, np.float32), (BATCH, 1))


def _head_weight(wd):
    # wd: (TAGSET, 2*S1) torch `dense` weight over per-batch [c1 ; c2] positions;
    # expanded so that one (B*T, 2*B*S1) matmul against the stacked `line` output
    # produces the logits of both examples.
    wd = np.asarray(wd, np.float32)
    S1 = NUM_CHANNELS[-1]
    W = np.zeros((BATCH * TAGSET, 2 * BATCH * S1), np.float32)
    for b in range(BATCH):
        W[b * TAGSET:(b + 1) * TAGSET, b * S1:(b + 1) * S1] = wd[:, :S1]
        W[b * TAGSET:(b + 1) * TAGSET,
          BATCH * S1 + b * S1:BATCH * S1 + (b + 1) * S1] = wd[:, S1:]
    return W


def pack_params(params):
    """Pack every weight / bias / constant into one bf16 (SLAB_ROWS, 128) slab."""
    slab = np.zeros((SLAB_ROWS, SLAB_WIDTH), np.float32)

    def put(name, arr):
        arr = np.asarray(arr, np.float32)
        if arr.ndim == 1:
            arr = arr[:, None]
        r0, nr, nc = LAYOUT[name]
        assert arr.shape == (nr, nc), (name, arr.shape, (nr, nc))
        slab[r0:r0 + nr, :nc] = arr

    S1 = NUM_CHANNELS[-1]
    for i in range(len(NUM_CHANNELS)):
        put(f"shift{i}", _shift_matrix(HIDDEN, 2 ** i))
    put("mask_s", _batch_mask(np.arange(BATCH * S1) // S1))
    put("mask_d", _batch_mask((np.arange(2 * BATCH * S1) // S1) % BATCH))

    for tag, blocks in (("c1", params["cnn1"]), ("c2", params["cnn2"])):
        c_in = MAX_SENT_LEN
        for i, c_out in enumerate(NUM_CHANNELS):
            blk = blocks[i]
            put(f"{tag}b{i}_wc1", _blockdiag(blk["w1"][1]))   # tap at x[t]
            put(f"{tag}b{i}_wp1", _blockdiag(blk["w1"][0]))   # tap at x[t - d]
            put(f"{tag}b{i}_b1", _stack_bias(blk["b1"]))
            put(f"{tag}b{i}_wc2", _blockdiag(blk["w2"][1]))
            put(f"{tag}b{i}_wp2", _blockdiag(blk["w2"][0]))
            put(f"{tag}b{i}_b2", _stack_bias(blk["b2"]))
            if c_in != c_out:
                put(f"{tag}b{i}_wd", _blockdiag(blk["wd"]))
                put(f"{tag}b{i}_bd", _stack_bias(blk["bd"]))
            c_in = c_out

    for tag, att in (("a1", params["att1"]), ("a2", params["att2"]),
                     ("ad", params["dot"])):
        for n in ("wq", "wk", "wv", "bq", "bk", "bv"):
            put(f"{tag}_{n}", att[n])

    hp = params["head"]
    put("wl", hp["wl"])
    put("bl", hp["bl"])
    put("w_head", _head_weight(hp["wd"]))
    put("b_head", _stack_bias(hp["bd"]))

    return jnp.asarray(slab, dtype=BF16)


# ============================ fused forward kernel ==================================
def make_fused_kernel(layout, B, C0, channels, H, T):
    n_blocks = len(channels)
    inv_sqrt_h = 1.0 / math.sqrt(H)

    def kernel(x1_ref, x2_ref, slab_ref, out_ref):
        def get(name):                       # bf16 view of a packed operand
            r0, nr, nc = layout[name]
            return slab_ref[r0:r0 + nr, 0:nc]

        def getf(name):
            return get(name).astype(F32)

        def mm(a, b):                        # A @ B, f32 accumulation on the MXU
            return jnp.dot(a, b, preferred_element_type=F32)

        def mm_t(a, b):                      # A @ B.T
            return jax.lax.dot_general(a, b, (((1,), (1,)), ((), ())),
                                       preferred_element_type=F32)

        shifts = [get(f"shift{i}") for i in range(n_blocks)]

        def tcn(x, tag):
            # x: (B*C, L) bf16, batch stacked on sublanes; conv weights are
            # block-diagonal over the batch so one matmul covers both examples.
            h, c_in = x, C0
            for i, c_out in enumerate(channels):
                s = shifts[i]
                # TODO(synk): swap h @ S for pltpu.roll + lane mask once lane-axis
                # roll on sub-128 widths is confirmed to lower on this toolchain.
                past = mm(h, s).astype(BF16)                 # x[:, t-d], causal 0-pad
                o = jnp.maximum(mm(get(f"{tag}b{i}_wc1"), h)
                                + mm(get(f"{tag}b{i}_wp1"), past)
                                + getf(f"{tag}b{i}_b1"), 0.0).astype(BF16)
                past2 = mm(o, s).astype(BF16)
                o2 = jnp.maximum(mm(get(f"{tag}b{i}_wc2"), o)
                                 + mm(get(f"{tag}b{i}_wp2"), past2)
                                 + getf(f"{tag}b{i}_b2"), 0.0)
                if c_in != c_out:                            # 1x1 downsample residual
                    res = mm(get(f"{tag}b{i}_wd"), h) + getf(f"{tag}b{i}_bd")
                else:
                    res = h.astype(F32)
                h = jnp.maximum(o2 + res, 0.0).astype(BF16)
                c_in = c_out
            return h                                         # (B*S1, L) bf16

        def attention(x, tag, mask_name):
            # Batched single-head attention; the additive block mask keeps every
            # query inside its own example, so the batch stays on the sublane axis
            # and no per-batch slicing is needed.
            q = (mm(x, get(f"{tag}_wq")) + getf(f"{tag}_bq")).astype(BF16)
            k = (mm(x, get(f"{tag}_wk")) + getf(f"{tag}_bk")).astype(BF16)
            v = (mm(x, get(f"{tag}_wv")) + getf(f"{tag}_bv")).astype(BF16)
            s = mm_t(q, k) * inv_sqrt_h + getf(mask_name)
            m = jnp.max(s, axis=-1, keepdims=True)
            e = jnp.exp(s - m)
            p = (e / jnp.sum(e, axis=-1, keepdims=True)).astype(BF16)
            return mm(p, v)                                  # (rows, H) f32

        a1 = tcn(x1_ref[...], "c1")                          # cnn1
        a2 = tcn(x2_ref[...], "c2")                          # cnn2
        c1 = attention(a1, "a1", "mask_s")                   # self_att1
        c2 = attention(a2, "a2", "mask_s")                   # self_att2
        cat = jnp.concatenate([c1.astype(BF16), c2.astype(BF16)], axis=0)
        ctx = attention(cat, "ad", "mask_d")                 # dot_att, (2*B*S1, H)

        # line (H->1) then batch-expanded dense; single full store of the logits.
        z = (mm(ctx.astype(BF16), get("wl")) + getf("bl")).astype(BF16)   # (2*B*S1, 1)
        out_ref[...] = mm(get("w_head"), z) + getf("b_head")              # (B*T, 1)

    return kernel


# ================================ fused wrapper =====================================
def fused_logits(x1, x2, slab):
    """x1, x2: (B, MAX_SENT_LEN, HIDDEN) -> dense logits (B, TAGSET), one pallas_call."""
    B, C0, L = x1.shape
    # fold the batch onto the sublane axis: (B, C, L) -> (B*C, L)
    x1s = x1.reshape(B * C0, L).astype(BF16)
    x2s = x2.reshape(B * C0, L).astype(BF16)

    kernel = make_fused_kernel(LAYOUT, B, C0, NUM_CHANNELS, HIDDEN, TAGSET)
    vmem = pl.BlockSpec(memory_space=pltpu.MemorySpace.VMEM)  # whole arrays, VMEM resident
    logits_col = pl.pallas_call(
        kernel,
        out_shape=jax.ShapeDtypeStruct((B * TAGSET, 1), F32),
        in_specs=[vmem, vmem, vmem],
        out_specs=vmem,
    )(x1s, x2s, slab)
    return logits_col[:, 0].reshape(B, TAGSET)


# ============================ parameters (synthetic) =================================
def init_params(key):
    keys = iter(jax.random.split(key, 64))

    def nrm(shape, scale=0.1):
        return scale * jax.random.normal(next(keys), shape, F32)

    def tcn_params():
        blocks = []
        c_in = MAX_SENT_LEN
        for i, c_out in enumerate(NUM_CHANNELS):
            blk = dict(
                w1=nrm((KSIZE, c_out, c_in)), b1=nrm((c_out, 1)),
                w2=nrm((KSIZE, c_out, c_out)), b2=nrm((c_out, 1)),
                wd=nrm((c_out, c_in)) if c_in != c_out else None,
                bd=nrm((c_out, 1)) if c_in != c_out else None,
            )
            blocks.append(blk)
            c_in = c_out
        return blocks

    def attn_params():
        return dict(wq=nrm((HIDDEN, HIDDEN)), bq=nrm((1, HIDDEN)),
                    wk=nrm((HIDDEN, HIDDEN)), bk=nrm((1, HIDDEN)),
                    wv=nrm((HIDDEN, HIDDEN)), bv=nrm((1, HIDDEN)))

    head_p = dict(wl=nrm((HIDDEN, 1)), bl=nrm((1, 1)),
                  wd=nrm((TAGSET, 2 * NUM_CHANNELS[-1])), bd=nrm((TAGSET, 1)))

    return dict(cnn1=tcn_params(), cnn2=tcn_params(),
                att1=attn_params(), att2=attn_params(), dot=attn_params(),
                head=head_p)


# ================================== forward =========================================
def forward(x1, x2, tags, slab):
    x1 = x1[0]                                # .squeeze(0) -> (B, MAX_SENT_LEN, HIDDEN)
    x2 = x2[0]
    logits = fused_logits(x1, x2, slab)       # dense output           (B, T)
    probs = jax.nn.softmax(logits, axis=-1)   # self.soft(x)

    B, T = probs.shape
    tags = tags.astype(jnp.int32)

    # _soft_target (try/except on bad indices -> last class)
    safe = jnp.where((tags >= 0) & (tags < T), tags, T - 1)
    label = jnp.ones((B, T), F32).at[jnp.arange(B), safe].set(100.0)

    # get_acc (label_from_output == argmax)
    acc = jnp.mean((jnp.argmax(probs, axis=-1) == tags).astype(F32))

    y = jnp.where(acc >= 0.5,
                  jax.nn.softmax(label, axis=-1),
                  jax.nn.softmax(label / 100.0, axis=-1))

    # CrossEntropyLoss with soft targets on the (already softmaxed) probs — matches
    # the original module's Softmax-then-CrossEntropyLoss (double softmax preserved).
    logp = jax.nn.log_softmax(probs, axis=-1)
    loss = -jnp.mean(jnp.sum(y * logp, axis=-1))
    return loss, acc


# ==================================== main ===========================================
if __name__ == "__main__":
    key = jax.random.PRNGKey(0)
    kp, kx1, kx2, kt = jax.random.split(key, 4)
    params = init_params(kp)
    slab = pack_params(params)                # one bf16 (1568, 128) parameter slab

    # module inputs carry a leading size-1 dim which forward() squeezes off
    x1 = jax.random.normal(kx1, (1, BATCH, MAX_SENT_LEN, HIDDEN), F32)
    x2 = jax.random.normal(kx2, (1, BATCH, MAX_SENT_LEN, HIDDEN), F32)
    tags = jax.random.randint(kt, (BATCH,), 0, TAGSET)

    fwd = jax.jit(forward)
    loss, acc = fwd(x1, x2, tags, slab)
    jax.block_until_ready((loss, acc))
    print("KERNEL_OK")
</pallas_src>

<mosaic_0001>
module attributes {stable_mosaic.version = 11 : i64} {
  func.func @kernel(%arg0: memref<16x32xbf16, #tpu.memory_space<vmem>>, %arg1: memref<16x32xbf16, #tpu.memory_space<vmem>>, %arg2: memref<1568x128xbf16, #tpu.memory_space<vmem>>, %arg3: memref<8x1xf32, #tpu.memory_space<vmem>>) attributes {dimension_semantics = [], scalar_prefetch = 0 : i64, scratch_operands = 0 : i64, tpu.core_type = #tpu.core_type<tc>} {
    %c0 = arith.constant 0 : index
    %c0_0 = arith.constant 0 : index
    %0 = vector.load %arg2[%c0, %c0_0] : memref<1568x128xbf16, #tpu.memory_space<vmem>>, vector<32x32xbf16>
    %c32 = arith.constant 32 : index
    %c0_1 = arith.constant 0 : index
    %1 = vector.load %arg2[%c32, %c0_1] : memref<1568x128xbf16, #tpu.memory_space<vmem>>, vector<32x32xbf16>
    %c0_2 = arith.constant 0 : index
    %c0_3 = arith.constant 0 : index
    %2 = vector.load %arg0[%c0_2, %c0_3] : memref<16x32xbf16, #tpu.memory_space<vmem>>, vector<16x32xbf16>
    %cst = arith.constant dense<0.000000e+00> : vector<16x32xf32>
    %3 = tpu.matmul %2, %0, %cst {dimension_numbers = #tpu.dot_dimension_numbers<[1], [0], [0], [1], [0, 0, 1, 1], [], []>} : vector<16x32xbf16>, vector<32x32xbf16>, vector<16x32xf32> -> vector<16x32xf32>
    %4 = arith.truncf %3 : vector<16x32xf32> to vector<16x32xbf16>
    %c160 = arith.constant 160 : index
    %c0_4 = arith.constant 0 : index
    %5 = vector.load %arg2[%c160, %c0_4] : memref<1568x128xbf16, #tpu.memory_space<vmem>>, vector<32x16xbf16>
    %cst_5 = arith.constant dense<0.000000e+00> : vector<32x32xf32>
    %6 = tpu.matmul %5, %2, %cst_5 {dimension_numbers = #tpu.dot_dimension_numbers<[1], [0], [0], [1], [0, 0, 1, 1], [], []>} : vector<32x16xbf16>, vector<16x32xbf16>, vector<32x32xf32> -> vector<32x32xf32>
    %c192 = arith.constant 192 : index
    %c0_6 = arith.constant 0 : index
    %7 = vector.load %arg2[%c192, %c0_6] : memref<1568x128xbf16, #tpu.memory_space<vmem>>, vector<32x16xbf16>
    %cst_7 = arith.constant dense<0.000000e+00> : vector<32x32xf32>
    %8 = tpu.matmul %7, %4, %cst_7 {dimension_numbers = #tpu.dot_dimension_numbers<[1], [0], [0], [1], [0, 0, 1, 1], [], []>} : vector<32x16xbf16>, vector<16x32xbf16>, vector<32x32xf32> -> vector<32x32xf32>
    %9 = arith.addf %6, %8 : vector<32x32xf32>
    %c224 = arith.constant 224 : index
    %c0_8 = arith.constant 0 : index
    %10 = vector.load %arg2[%c224, %c0_8] : memref<1568x128xbf16, #tpu.memory_space<vmem>>, vector<32x1xbf16>
    %11 = arith.extf %10 : vector<32x1xbf16> to vector<32x1xf32>
    %12 = vector.broadcast %11 : vector<32x1xf32> to vector<32x32xf32>
    %13 = arith.addf %9, %12 : vector<32x32xf32>
    %cst_9 = arith.constant 0.000000e+00 : f32
    %14 = vector.broadcast %cst_9 : f32 to vector<32x32xf32>
    %15 = arith.maximumf %13, %14 : vector<32x32xf32>
    %16 = arith.truncf %15 : vector<32x32xf32> to vector<32x32xbf16>
    %cst_10 = arith.constant dense<0.000000e+00> : vector<32x32xf32>
    %17 = tpu.matmul %16, %0, %cst_10 {dimension_numbers = #tpu.dot_dimension_numbers<[1], [0], [0], [1], [0, 0, 1, 1], [], []>} : vector<32x32xbf16>, vector<32x32xbf16>, vector<32x32xf32> -> vector<32x32xf32>
    %18 = arith.truncf %17 : vector<32x32xf32> to vector<32x32xbf16>
    %c256 = arith.constant 256 : index
    %c0_11 = arith.constant 0 : index
    %19 = vector.load %arg2[%c256, %c0_11] : memref<1568x128xbf16, #tpu.memory_space<vmem>>, vector<32x32xbf16>
    %cst_12 = arith.constant dense<0.000000e+00> : vector<32x32xf32>
    %20 = tpu.matmul %19, %16, %cst_12 {dimension_numbers = #tpu.dot_dimension_numbers<[1], [0], [0], [1], [0, 0, 1, 1], [], []>} : vector<32x32xbf16>, vector<32x32xbf16>, vector<32x32xf32> -> vector<32x32xf32>
    %c288 = arith.constant 288 : index
    %c0_13 = arith.constant 0 : index
    %21 = vector.load %arg2[%c288, %c0_13] : memref<1568x128xbf16, #tpu.memory_space<vmem>>, vector<32x32xbf16>
    %cst_14 = arith.constant dense<0.000000e+00> : vector<32x32xf32>
    %22 = tpu.matmul %21, %18, %cst_14 {dimension_numbers = #tpu.dot_dimension_numbers<[1], [0], [0], [1], [0, 0, 1, 1], [], []>} : vector<32x32xbf16>, vector<32x32xbf16>, vector<32x32xf32> -> vector<32x32xf32>
    %23 = arith.addf %20, %22 : vector<32x32xf32>
    %c320 = arith.constant 320 : index
    %c0_15 = arith.constant 0 : index
    %24 = vector.load %arg2[%c320, %c0_15] : memref<1568x128xbf16, #tpu.memory_space<vmem>>, vector<32x1xbf16>
    %25 = arith.extf %24 : vector<32x1xbf16> to vector<32x1xf32>
    %26 = vector.broadcast %25 : vector<32x1xf32> to vector<32x32xf32>
    %27 = arith.addf %23, %26 : vector<32x32xf32>
    %cst_16 = arith.constant 0.000000e+00 : f32
    %28 = vector.broadcast %cst_16 : f32 to vector<32x32xf32>
    %29 = arith.maximumf %27, %28 : vector<32x32xf32>
    %c352 = arith.constant 352 : index
    %c0_17 = arith.constant 0 : index
    %30 = vector.load %arg2[%c352, %c0_17] : memref<1568x128xbf16, #tpu.memory_space<vmem>>, vector<32x16xbf16>
    %cst_18 = arith.constant dense<0.000000e+00> : vector<32x32xf32>
    %31 = tpu.matmul %30, %2, %cst_18 {dimension_numbers = #tpu.dot_dimension_numbers<[1], [0], [0], [1], [0, 0, 1, 1], [], []>} : vector<32x16xbf16>, vector<16x32xbf16>, vector<32x32xf32> -> vector<32x32xf32>
    %c384 = arith.constant 384 : index
    %c0_19 = arith.constant 0 : index
    %32 = vector.load %arg2[%c384, %c0_19] : memref<1568x128xbf16, #tpu.memory_space<vmem>>, vector<32x1xbf16>
    %33 = arith.extf %32 : vector<32x1xbf16> to vector<32x1xf32>
    %34 = vector.broadcast %33 : vector<32x1xf32> to vector<32x32xf32>
    %35 = arith.addf %31, %34 : vector<32x32xf32>
    %36 = arith.addf %29, %35 : vector<32x32xf32>
    %cst_20 = arith.constant 0.000000e+00 : f32
    %37 = vector.broadcast %cst_20 : f32 to vector<32x32xf32>
    %38 = arith.maximumf %36, %37 : vector<32x32xf32>
    %39 = arith.truncf %38 : vector<32x32xf32> to vector<32x32xbf16>
    %cst_21 = arith.constant dense<0.000000e+00> : vector<32x32xf32>
    %40 = tpu.matmul %39, %1, %cst_21 {dimension_numbers = #tpu.dot_dimension_numbers<[1], [0], [0], [1], [0, 0, 1, 1], [], []>} : vector<32x32xbf16>, vector<32x32xbf16>, vector<32x32xf32> -> vector<32x32xf32>
    %41 = arith.truncf %40 : vector<32x32xf32> to vector<32x32xbf16>
    %c416 = arith.constant 416 : index
    %c0_22 = arith.constant 0 : index
    %42 = vector.load %arg2[%c416, %c0_22] : memref<1568x128xbf16, #tpu.memory_space<vmem>>, vector<32x32xbf16>
    %cst_23 = arith.constant dense<0.000000e+00> : vector<32x32xf32>
    %43 = tpu.matmul %42, %39, %cst_23 {dimension_numbers = #tpu.dot_dimension_numbers<[1], [0], [0], [1], [0, 0, 1, 1], [], []>} : vector<32x32xbf16>, vector<32x32xbf16>, vector<32x32xf32> -> vector<32x32xf32>
    %c448 = arith.constant 448 : index
    %c0_24 = arith.constant 0 : index
    %44 = vector.load %arg2[%c448, %c0_24] : memref<1568x128xbf16, #tpu.memory_space<vmem>>, vector<32x32xbf16>
    %cst_25 = arith.constant dense<0.000000e+00> : vector<32x32xf32>
    %45 = tpu.matmul %44, %41, %cst_25 {dimension_numbers = #tpu.dot_dimension_numbers<[1], [0], [0], [1], [0, 0, 1, 1], [], []>} : vector<32x32xbf16>, vector<32x32xbf16>, vector<32x32xf32> -> vector<32x32xf32>
    %46 = arith.addf %43, %45 : vector<32x32xf32>
    %c480 = arith.constant 480 : index
    %c0_26 = arith.constant 0 : index
    %47 = vector.load %arg2[%c480, %c0_26] : memref<1568x128xbf16, #tpu.memory_space<vmem>>, vector<32x1xbf16>
    %48 = arith.extf %47 : vector<32x1xbf16> to vector<32x1xf32>
    %49 = vector.broadcast %48 : vector<32x1xf32> to vector<32x32xf32>
    %50 = arith.addf %46, %49 : vector<32x32xf32>
    %cst_27 = arith.constant 0.000000e+00 : f32
    %51 = vector.broadcast %cst_27 : f32 to vector<32x32xf32>
    %52 = arith.maximumf %50, %51 : vector<32x32xf32>
    %53 = arith.truncf %52 : vector<32x32xf32> to vector<32x32xbf16>
    %cst_28 = arith.constant dense<0.000000e+00> : vector<32x32xf32>
    %54 = tpu.matmul %53, %1, %cst_28 {dimension_numbers = #tpu.dot_dimension_numbers<[1], [0], [0], [1], [0, 0, 1, 1], [], []>} : vector<32x32xbf16>, vector<32x32xbf16>, vector<32x32xf32> -> vector<32x32xf32>
    %55 = arith.truncf %54 : vector<32x32xf32> to vector<32x32xbf16>
    %c512 = arith.constant 512 : index
    %c0_29 = arith.constant 0 : index
    %56 = vector.load %arg2[%c512, %c0_29] : memref<1568x128xbf16, #tpu.memory_space<vmem>>, vector<32x32xbf16>
    %cst_30 = arith.constant dense<0.000000e+00> : vector<32x32xf32>
    %57 = tpu.matmul %56, %53, %cst_30 {dimension_numbers = #tpu.dot_dimension_numbers<[1], [0], [0], [1], [0, 0, 1, 1], [], []>} : vector<32x32xbf16>, vector<32x32xbf16>, vector<32x32xf32> -> vector<32x32xf32>
    %c544 = arith.constant 544 : index
    %c0_31 = arith.constant 0 : index
    %58 = vector.load %arg2[%c544, %c0_31] : memref<1568x128xbf16, #tpu.memory_space<vmem>>, vector<32x32xbf16>
    %cst_32 = arith.constant dense<0.000000e+00> : vector<32x32xf32>
    %59 = tpu.matmul %58, %55, %cst_32 {dimension_numbers = #tpu.dot_dimension_numbers<[1], [0], [0], [1], [0, 0, 1, 1], [], []>} : vector<32x32xbf16>, vector<32x32xbf16>, vector<32x32xf32> -> vector<32x32xf32>
    %60 = arith.addf %57, %59 : vector<32x32xf32>
    %c576 = arith.constant 576 : index
    %c0_33 = arith.constant 0 : index
    %61 = vector.load %arg2[%c576, %c0_33] : memref<1568x128xbf16, #tpu.memory_space<vmem>>, vector<32x1xbf16>
    %62 = arith.extf %61 : vector<32x1xbf16> to vector<32x1xf32>
    %63 = vector.broadcast %62 : vector<32x1xf32> to vector<32x32xf32>
    %64 = arith.addf %60, %63 : vector<32x32xf32>
    %cst_34 = arith.constant 0.000000e+00 : f32
    %65 = vector.broadcast %cst_34 : f32 to vector<32x32xf32>
    %66 = arith.maximumf %64, %65 : vector<32x32xf32>
    %67 = arith.extf %39 : vector<32x32xbf16> to vector<32x32xf32>
    %68 = arith.addf %66, %67 : vector<32x32xf32>
    %cst_35 = arith.constant 0.000000e+00 : f32
    %69 = vector.broadcast %cst_35 : f32 to vector<32x32xf32>
    %70 = arith.maximumf %68, %69 : vector<32x32xf32>
    %71 = arith.truncf %70 : vector<32x32xf32> to vector<32x32xbf16>
    %c0_36 = arith.constant 0 : index
    %c0_37 = arith.constant 0 : index
    %72 = vector.load %arg1[%c0_36, %c0_37] : memref<16x32xbf16, #tpu.memory_space<vmem>>, vector<16x32xbf16>
    %cst_38 = arith.constant dense<0.000000e+00> : vector<16x32xf32>
    %73 = tpu.matmul %72, %0, %cst_38 {dimension_numbers = #tpu.dot_dimension_numbers<[1], [0], [0], [1], [0, 0, 1, 1], [], []>} : vector<16x32xbf16>, vector<32x32xbf16>, vector<16x32xf32> -> vector<16x32xf32>
    %74 = arith.truncf %73 : vector<16x32xf32> to vector<16x32xbf16>
    %c608 = arith.constant 608 : index
    %c0_39 = arith.constant 0 : index
    %75 = vector.load %arg2[%c608, %c0_39] : memref<1568x128xbf16, #tpu.memory_space<vmem>>, vector<32x16xbf16>
    %cst_40 = arith.constant dense<0.000000e+00> : vector<32x32xf32>
    %76 = tpu.matmul %75, %72, %cst_40 {dimension_numbers = #tpu.dot_dimension_numbers<[1], [0], [0], [1], [0, 0, 1, 1], [], []>} : vector<32x16xbf16>, vector<16x32xbf16>, vector<32x32xf32> -> vector<32x32xf32>
    %c640 = arith.constant 640 : index
    %c0_41 = arith.constant 0 : index
    %77 = vector.load %arg2[%c640, %c0_41] : memref<1568x128xbf16, #tpu.memory_space<vmem>>, vector<32x16xbf16>
    %cst_42 = arith.constant dense<0.000000e+00> : vector<32x32xf32>
    %78 = tpu.matmul %77, %74, %cst_42 {dimension_numbers = #tpu.dot_dimension_numbers<[1], [0], [0], [1], [0, 0, 1, 1], [], []>} : vector<32x16xbf16>, vector<16x32xbf16>, vector<32x32xf32> -> vector<32x32xf32>
    %79 = arith.addf %76, %78 : vector<32x32xf32>
    %c672 = arith.constant 672 : index
    %c0_43 = arith.constant 0 : index
    %80 = vector.load %arg2[%c672, %c0_43] : memref<1568x128xbf16, #tpu.memory_space<vmem>>, vector<32x1xbf16>
    %81 = arith.extf %80 : vector<32x1xbf16> to vector<32x1xf32>
    %82 = vector.broadcast %81 : vector<32x1xf32> to vector<32x32xf32>
    %83 = arith.addf %79, %82 : vector<32x32xf32>
    %cst_44 = arith.constant 0.000000e+00 : f32
    %84 = vector.broadcast %cst_44 : f32 to vector<32x32xf32>
    %85 = arith.maximumf %83, %84 : vector<32x32xf32>
    %86 = arith.truncf %85 : vector<32x32xf32> to vector<32x32xbf16>
    %cst_45 = arith.constant dense<0.000000e+00> : vector<32x32xf32>
    %87 = tpu.matmul %86, %0, %cst_45 {dimension_numbers = #tpu.dot_dimension_numbers<[1], [0], [0], [1], [0, 0, 1, 1], [], []>} : vector<32x32xbf16>, vector<32x32xbf16>, vector<32x32xf32> -> vector<32x32xf32>
    %88 = arith.truncf %87 : vector<32x32xf32> to vector<32x32xbf16>
    %c704 = arith.constant 704 : index
    %c0_46 = arith.constant 0 : index
    %89 = vector.load %arg2[%c704, %c0_46] : memref<1568x128xbf16, #tpu.memory_space<vmem>>, vector<32x32xbf16>
    %cst_47 = arith.constant dense<0.000000e+00> : vector<32x32xf32>
    %90 = tpu.matmul %89, %86, %cst_47 {dimension_numbers = #tpu.dot_dimension_numbers<[1], [0], [0], [1], [0, 0, 1, 1], [], []>} : vector<32x32xbf16>, vector<32x32xbf16>, vector<32x32xf32> -> vector<32x32xf32>
    %c736 = arith.constant 736 : index
    %c0_48 = arith.constant 0 : index
    %91 = vector.load %arg2[%c736, %c0_48] : memref<1568x128xbf16, #tpu.memory_space<vmem>>, vector<32x32xbf16>
    %cst_49 = arith.constant dense<0.000000e+00> : vector<32x32xf32>
    %92 = tpu.matmul %91, %88, %cst_49 {dimension_numbers = #tpu.dot_dimension_numbers<[1], [0], [0], [1], [0, 0, 1, 1], [], []>} : vector<32x32xbf16>, vector<32x32xbf16>, vector<32x32xf32> -> vector<32x32xf32>
    %93 = arith.addf %90, %92 : vector<32x32xf32>
    %c768 = arith.constant 768 : index
    %c0_50 = arith.constant 0 : index
    %94 = vector.load %arg2[%c768, %c0_50] : memref<1568x128xbf16, #tpu.memory_space<vmem>>, vector<32x1xbf16>
    %95 = arith.extf %94 : vector<32x1xbf16> to vector<32x1xf32>
    %96 = vector.broadcast %95 : vector<32x1xf32> to vector<32x32xf32>
    %97 = arith.addf %93, %96 : vector<32x32xf32>
    %cst_51 = arith.constant 0.000000e+00 : f32
    %98 = vector.broadcast %cst_51 : f32 to vector<32x32xf32>
    %99 = arith.maximumf %97, %98 : vector<32x32xf32>
    %c800 = arith.constant 800 : index
    %c0_52 = arith.constant 0 : index
    %100 = vector.load %arg2[%c800, %c0_52] : memref<1568x128xbf16, #tpu.memory_space<vmem>>, vector<32x16xbf16>
    %cst_53 = arith.constant dense<0.000000e+00> : vector<32x32xf32>
    %101 = tpu.matmul %100, %72, %cst_53 {dimension_numbers = #tpu.dot_dimension_numbers<[1], [0], [0], [1], [0, 0, 1, 1], [], []>} : vector<32x16xbf16>, vector<16x32xbf16>, vector<32x32xf32> -> vector<32x32xf32>
    %c832 = arith.constant 832 : index
    %c0_54 = arith.constant 0 : index
    %102 = vector.load %arg2[%c832, %c0_54] : memref<1568x128xbf16, #tpu.memory_space<vmem>>, vector<32x1xbf16>
    %103 = arith.extf %102 : vector<32x1xbf16> to vector<32x1xf32>
    %104 = vector.broadcast %103 : vector<32x1xf32> to vector<32x32xf32>
    %105 = arith.addf %101, %104 : vector<32x32xf32>
    %106 = arith.addf %99, %105 : vector<32x32xf32>
    %cst_55 = arith.constant 0.000000e+00 : f32
    %107 = vector.broadcast %cst_55 : f32 to vector<32x32xf32>
    %108 = arith.maximumf %106, %107 : vector<32x32xf32>
    %109 = arith.truncf %108 : vector<32x32xf32> to vector<32x32xbf16>
    %cst_56 = arith.constant dense<0.000000e+00> : vector<32x32xf32>
    %110 = tpu.matmul %109, %1, %cst_56 {dimension_numbers = #tpu.dot_dimension_numbers<[1], [0], [0], [1], [0, 0, 1, 1], [], []>} : vector<32x32xbf16>, vector<32x32xbf16>, vector<32x32xf32> -> vector<32x32xf32>
    %111 = arith.truncf %110 : vector<32x32xf32> to vector<32x32xbf16>
    %c864 = arith.constant 864 : index
    %c0_57 = arith.constant 0 : index
    %112 = vector.load %arg2[%c864, %c0_57] : memref<1568x128xbf16, #tpu.memory_space<vmem>>, vector<32x32xbf16>
    %cst_58 = arith.constant dense<0.000000e+00> : vector<32x32xf32>
    %113 = tpu.matmul %112, %109, %cst_58 {dimension_numbers = #tpu.dot_dimension_numbers<[1], [0], [0], [1], [0, 0, 1, 1], [], []>} : vector<32x32xbf16>, vector<32x32xbf16>, vector<32x32xf32> -> vector<32x32xf32>
    %c896 = arith.constant 896 : index
    %c0_59 = arith.constant 0 : index
    %114 = vector.load %arg2[%c896, %c0_59] : memref<1568x128xbf16, #tpu.memory_space<vmem>>, vector<32x32xbf16>
    %cst_60 = arith.constant dense<0.000000e+00> : vector<32x32xf32>
    %115 = tpu.matmul %114, %111, %cst_60 {dimension_numbers = #tpu.dot_dimension_numbers<[1], [0], [0], [1], [0, 0, 1, 1], [], []>} : vector<32x32xbf16>, vector<32x32xbf16>, vector<32x32xf32> -> vector<32x32xf32>
    %116 = arith.addf %113, %115 : vector<32x32xf32>
    %c928 = arith.constant 928 : index
    %c0_61 = arith.constant 0 : index
    %117 = vector.load %arg2[%c928, %c0_61] : memref<1568x128xbf16, #tpu.memory_space<vmem>>, vector<32x1xbf16>
    %118 = arith.extf %117 : vector<32x1xbf16> to vector<32x1xf32>
    %119 = vector.broadcast %118 : vector<32x1xf32> to vector<32x32xf32>
    %120 = arith.addf %116, %119 : vector<32x32xf32>
    %cst_62 = arith.constant 0.000000e+00 : f32
    %121 = vector.broadcast %cst_62 : f32 to vector<32x32xf32>
    %122 = arith.maximumf %120, %121 : vector<32x32xf32>
    %123 = arith.truncf %122 : vector<32x32xf32> to vector<32x32xbf16>
    %cst_63 = arith.constant dense<0.000000e+00> : vector<32x32xf32>
    %124 = tpu.matmul %123, %1, %cst_63 {dimension_numbers = #tpu.dot_dimension_numbers<[1], [0], [0], [1], [0, 0, 1, 1], [], []>} : vector<32x32xbf16>, vector<32x32xbf16>, vector<32x32xf32> -> vector<32x32xf32>
    %125 = arith.truncf %124 : vector<32x32xf32> to vector<32x32xbf16>
    %c960 = arith.constant 960 : index
    %c0_64 = arith.constant 0 : index
    %126 = vector.load %arg2[%c960, %c0_64] : memref<1568x128xbf16, #tpu.memory_space<vmem>>, vector<32x32xbf16>
    %cst_65 = arith.constant dense<0.000000e+00> : vector<32x32xf32>
    %127 = tpu.matmul %126, %123, %cst_65 {dimension_numbers = #tpu.dot_dimension_numbers<[1], [0], [0], [1], [0, 0, 1, 1], [], []>} : vector<32x32xbf16>, vector<32x32xbf16>, vector<32x32xf32> -> vector<32x32xf32>
    %c992 = arith.constant 992 : index
    %c0_66 = arith.constant 0 : index
    %128 = vector.load %arg2[%c992, %c0_66] : memref<1568x128xbf16, #tpu.memory_space<vmem>>, vector<32x32xbf16>
    %cst_67 = arith.constant dense<0.000000e+00> : vector<32x32xf32>
    %129 = tpu.matmul %128, %125, %cst_67 {dimension_numbers = #tpu.dot_dimension_numbers<[1], [0], [0], [1], [0, 0, 1, 1], [], []>} : vector<32x32xbf16>, vector<32x32xbf16>, vector<32x32xf32> -> vector<32x32xf32>
    %130 = arith.addf %127, %129 : vector<32x32xf32>
    %c1024 = arith.constant 1024 : index
    %c0_68 = arith.constant 0 : index
    %131 = vector.load %arg2[%c1024, %c0_68] : memref<1568x128xbf16, #tpu.memory_space<vmem>>, vector<32x1xbf16>
    %132 = arith.extf %131 : vector<32x1xbf16> to vector<32x1xf32>
    %133 = vector.broadcast %132 : vector<32x1xf32> to vector<32x32xf32>
    %134 = arith.addf %130, %133 : vector<32x32xf32>
    %cst_69 = arith.constant 0.000000e+00 : f32
    %135 = vector.broadcast %cst_69 : f32 to vector<32x32xf32>
    %136 = arith.maximumf %134, %135 : vector<32x32xf32>
    %137 = arith.extf %109 : vector<32x32xbf16> to vector<32x32xf32>
    %138 = arith.addf %136, %137 : vector<32x32xf32>
    %cst_70 = arith.constant 0.000000e+00 : f32
    %139 = vector.broadcast %cst_70 : f32 to vector<32x32xf32>
    %140 = arith.maximumf %138, %139 : vector<32x32xf32>
    %141 = arith.truncf %140 : vector<32x32xf32> to vector<32x32xbf16>
    %c1056 = arith.constant 1056 : index
    %c0_71 = arith.constant 0 : index
    %142 = vector.load %arg2[%c1056, %c0_71] : memref<1568x128xbf16, #tpu.memory_space<vmem>>, vector<32x32xbf16>
    %cst_72 = arith.constant dense<0.000000e+00> : vector<32x32xf32>
    %143 = tpu.matmul %71, %142, %cst_72 {dimension_numbers = #tpu.dot_dimension_numbers<[1], [0], [0], [1], [0, 0, 1, 1], [], []>} : vector<32x32xbf16>, vector<32x32xbf16>, vector<32x32xf32> -> vector<32x32xf32>
    %c1152 = arith.constant 1152 : index
    %c0_73 = arith.constant 0 : index
    %144 = vector.load %arg2[%c1152, %c0_73] : memref<1568x128xbf16, #tpu.memory_space<vmem>>, vector<1x32xbf16>
    %145 = arith.extf %144 : vector<1x32xbf16> to vector<1x32xf32>
    %146 = vector.broadcast %145 : vector<1x32xf32> to vector<32x32xf32>
    %147 = arith.addf %143, %146 : vector<32x32xf32>
    %148 = arith.truncf %147 : vector<32x32xf32> to vector<32x32xbf16>
    %c1088 = arith.constant 1088 : index
    %c0_74 = arith.constant 0 : index
    %149 = vector.load %arg2[%c1088, %c0_74] : memref<1568x128xbf16, #tpu.memory_space<vmem>>, vector<32x32xbf16>
    %cst_75 = arith.constant dense<0.000000e+00> : vector<32x32xf32>
    %150 = tpu.matmul %71, %149, %cst_75 {dimension_numbers = #tpu.dot_dimension_numbers<[1], [0], [0], [1], [0, 0, 1, 1], [], []>} : vector<32x32xbf16>, vector<32x32xbf16>, vector<32x32xf32> -> vector<32x32xf32>
    %c1168 = arith.constant 1168 : index
    %c0_76 = arith.constant 0 : index
    %151 = vector.load %arg2[%c1168, %c0_76] : memref<1568x128xbf16, #tpu.memory_space<vmem>>, vector<1x32xbf16>
    %152 = arith.extf %151 : vector<1x32xbf16> to vector<1x32xf32>
    %153 = vector.broadcast %152 : vector<1x32xf32> to vector<32x32xf32>
    %154 = arith.addf %150, %153 : vector<32x32xf32>
    %155 = arith.truncf %154 : vector<32x32xf32> to vector<32x32xbf16>
    %c1120 = arith.constant 1120 : index
    %c0_77 = arith.constant 0 : index
    %156 = vector.load %arg2[%c1120, %c0_77] : memref<1568x128xbf16, #tpu.memory_space<vmem>>, vector<32x32xbf16>
    %cst_78 = arith.constant dense<0.000000e+00> : vector<32x32xf32>
    %157 = tpu.matmul %71, %156, %cst_78 {dimension_numbers = #tpu.dot_dimension_numbers<[1], [0], [0], [1], [0, 0, 1, 1], [], []>} : vector<32x32xbf16>, vector<32x32xbf16>, vector<32x32xf32> -> vector<32x32xf32>
    %c1184 = arith.constant 1184 : index
    %c0_79 = arith.constant 0 : index
    %158 = vector.load %arg2[%c1184, %c0_79] : memref<1568x128xbf16, #tpu.memory_space<vmem>>, vector<1x32xbf16>
    %159 = arith.extf %158 : vector<1x32xbf16> to vector<1x32xf32>
    %160 = vector.broadcast %159 : vector<1x32xf32> to vector<32x32xf32>
    %161 = arith.addf %157, %160 : vector<32x32xf32>
    %162 = arith.truncf %161 : vector<32x32xf32> to vector<32x32xbf16>
    %cst_80 = arith.constant dense<0.000000e+00> : vector<32x32xf32>
    %163 = tpu.matmul %148, %155, %cst_80 {dimension_numbers = #tpu.dot_dimension_numbers<[1], [1], [0], [0], [0, 0, 1, 0], [], []>} : vector<32x32xbf16>, vector<32x32xbf16>, vector<32x32xf32> -> vector<32x32xf32>
    %cst_81 = arith.constant 0.176776692 : f32
    %164 = vector.broadcast %cst_81 : f32 to vector<32x32xf32>
    %165 = arith.mulf %163, %164 : vector<32x32xf32>
    %c64 = arith.constant 64 : index
    %c0_82 = arith.constant 0 : index
    %166 = vector.load %arg2[%c64, %c0_82] : memref<1568x128xbf16, #tpu.memory_space<vmem>>, vector<32x32xbf16>
    %167 = arith.extf %166 : vector<32x32xbf16> to vector<32x32xf32>
    %168 = arith.addf %165, %167 : vector<32x32xf32>
    %cst_83 = arith.constant dense<0xFF800000> : vector<32xf32>
    %169 = vector.multi_reduction <maximumf>, %168, %cst_83 [1] : vector<32x32xf32> to vector<32xf32>
    %170 = vector.shape_cast %169 : vector<32xf32> to vector<32x1xf32>
    %171 = vector.broadcast %170 : vector<32x1xf32> to vector<32x32xf32>
    %172 = arith.subf %168, %171 : vector<32x32xf32>
    %173 = math.exp %172 : vector<32x32xf32>
    %cst_84 = arith.constant dense<0.000000e+00> : vector<32xf32>
    %174 = vector.multi_reduction <add>, %173, %cst_84 [1] : vector<32x32xf32> to vector<32xf32>
    %175 = vector.shape_cast %174 : vector<32xf32> to vector<32x1xf32>
    %176 = vector.broadcast %175 : vector<32x1xf32> to vector<32x32xf32>
    %177 = arith.divf %173, %176 : vector<32x32xf32>
    %178 = arith.truncf %177 : vector<32x32xf32> to vector<32x32xbf16>
    %cst_85 = arith.constant dense<0.000000e+00> : vector<32x32xf32>
    %179 = tpu.matmul %178, %162, %cst_85 {dimension_numbers = #tpu.dot_dimension_numbers<[1], [0], [0], [1], [0, 0, 1, 1], [], []>} : vector<32x32xbf16>, vector<32x32xbf16>, vector<32x32xf32> -> vector<32x32xf32>
    %c1200 = arith.constant 1200 : index
    %c0_86 = arith.constant 0 : index
    %180 = vector.load %arg2[%c1200, %c0_86] : memref<1568x128xbf16, #tpu.memory_space<vmem>>, vector<32x32xbf16>
    %cst_87 = arith.constant dense<0.000000e+00> : vector<32x32xf32>
    %181 = tpu.matmul %141, %180, %cst_87 {dimension_numbers = #tpu.dot_dimension_numbers<[1], [0], [0], [1], [0, 0, 1, 1], [], []>} : vector<32x32xbf16>, vector<32x32xbf16>, vector<32x32xf32> -> vector<32x32xf32>
    %c1296 = arith.constant 1296 : index
    %c0_88 = arith.constant 0 : index
    %182 = vector.load %arg2[%c1296, %c0_88] : memref<1568x128xbf16, #tpu.memory_space<vmem>>, vector<1x32xbf16>
    %183 = arith.extf %182 : vector<1x32xbf16> to vector<1x32xf32>
    %184 = vector.broadcast %183 : vector<1x32xf32> to vector<32x32xf32>
    %185 = arith.addf %181, %184 : vector<32x32xf32>
    %186 = arith.truncf %185 : vector<32x32xf32> to vector<32x32xbf16>
    %c1232 = arith.constant 1232 : index
    %c0_89 = arith.constant 0 : index
    %187 = vector.load %arg2[%c1232, %c0_89] : memref<1568x128xbf16, #tpu.memory_space<vmem>>, vector<32x32xbf16>
    %cst_90 = arith.constant dense<0.000000e+00> : vector<32x32xf32>
    %188 = tpu.matmul %141, %187, %cst_90 {dimension_numbers = #tpu.dot_dimension_numbers<[1], [0], [0], [1], [0, 0, 1, 1], [], []>} : vector<32x32xbf16>, vector<32x32xbf16>, vector<32x32xf32> -> vector<32x32xf32>
    %c1312 = arith.constant 1312 : index
    %c0_91 = arith.constant 0 : index
    %189 = vector.load %arg2[%c1312, %c0_91] : memref<1568x128xbf16, #tpu.memory_space<vmem>>, vector<1x32xbf16>
    %190 = arith.extf %189 : vector<1x32xbf16> to vector<1x32xf32>
    %191 = vector.broadcast %190 : vector<1x32xf32> to vector<32x32xf32>
    %192 = arith.addf %188, %191 : vector<32x32xf32>
    %193 = arith.truncf %192 : vector<32x32xf32> to vector<32x32xbf16>
    %c1264 = arith.constant 1264 : index
    %c0_92 = arith.constant 0 : index
    %194 = vector.load %arg2[%c1264, %c0_92] : memref<1568x128xbf16, #tpu.memory_space<vmem>>, vector<32x32xbf16>
    %cst_93 = arith.constant dense<0.000000e+00> : vector<32x32xf32>
    %195 = tpu.matmul %141, %194, %cst_93 {dimension_numbers = #tpu.dot_dimension_numbers<[1], [0], [0], [1], [0, 0, 1, 1], [], []>} : vector<32x32xbf16>, vector<32x32xbf16>, vector<32x32xf32> -> vector<32x32xf32>
    %c1328 = arith.constant 1328 : index
    %c0_94 = arith.constant 0 : index
    %196 = vector.load %arg2[%c1328, %c0_94] : memref<1568x128xbf16, #tpu.memory_space<vmem>>, vector<1x32xbf16>
    %197 = arith.extf %196 : vector<1x32xbf16> to vector<1x32xf32>
    %198 = vector.broadcast %197 : vector<1x32xf32> to vector<32x32xf32>
    %199 = arith.addf %195, %198 : vector<32x32xf32>
    %200 = arith.truncf %199 : vector<32x32xf32> to vector<32x32xbf16>
    %cst_95 = arith.constant dense<0.000000e+00> : vector<32x32xf32>
    %201 = tpu.matmul %186, %193, %cst_95 {dimension_numbers = #tpu.dot_dimension_numbers<[1], [1], [0], [0], [0, 0, 1, 0], [], []>} : vector<32x32xbf16>, vector<32x32xbf16>, vector<32x32xf32> -> vector<32x32xf32>
    %cst_96 = arith.constant 0.176776692 : f32
    %202 = vector.broadcast %cst_96 : f32 to vector<32x32xf32>
    %203 = arith.mulf %201, %202 : vector<32x32xf32>
    %c64_97 = arith.constant 64 : index
    %c0_98 = arith.constant 0 : index
    %204 = vector.load %arg2[%c64_97, %c0_98] : memref<1568x128xbf16, #tpu.memory_space<vmem>>, vector<32x32xbf16>
    %205 = arith.extf %204 : vector<32x32xbf16> to vector<32x32xf32>
    %206 = arith.addf %203, %205 : vector<32x32xf32>
    %cst_99 = arith.constant dense<0xFF800000> : vector<32xf32>
    %207 = vector.multi_reduction <maximumf>, %206, %cst_99 [1] : vector<32x32xf32> to vector<32xf32>
    %208 = vector.shape_cast %207 : vector<32xf32> to vector<32x1xf32>
    %209 = vector.broadcast %208 : vector<32x1xf32> to vector<32x32xf32>
    %210 = arith.subf %206, %209 : vector<32x32xf32>
    %211 = math.exp %210 : vector<32x32xf32>
    %cst_100 = arith.constant dense<0.000000e+00> : vector<32xf32>
    %212 = vector.multi_reduction <add>, %211, %cst_100 [1] : vector<32x32xf32> to vector<32xf32>
    %213 = vector.shape_cast %212 : vector<32xf32> to vector<32x1xf32>
    %214 = vector.broadcast %213 : vector<32x1xf32> to vector<32x32xf32>
    %215 = arith.divf %211, %214 : vector<32x32xf32>
    %216 = arith.truncf %215 : vector<32x32xf32> to vector<32x32xbf16>
    %cst_101 = arith.constant dense<0.000000e+00> : vector<32x32xf32>
    %217 = tpu.matmul %216, %200, %cst_101 {dimension_numbers = #tpu.dot_dimension_numbers<[1], [0], [0], [1], [0, 0, 1, 1], [], []>} : vector<32x32xbf16>, vector<32x32xbf16>, vector<32x32xf32> -> vector<32x32xf32>
    %218 = arith.truncf %179 : vector<32x32xf32> to vector<32x32xbf16>
    %219 = arith.truncf %217 : vector<32x32xf32> to vector<32x32xbf16>
    %220 = tpu.concatenate %218, %219 in 0 : vector<32x32xbf16>, vector<32x32xbf16> -> vector<64x32xbf16>
    %c1344 = arith.constant 1344 : index
    %c0_102 = arith.constant 0 : index
    %221 = vector.load %arg2[%c1344, %c0_102] : memref<1568x128xbf16, #tpu.memory_space<vmem>>, vector<32x32xbf16>
    %cst_103 = arith.constant dense<0.000000e+00> : vector<64x32xf32>
    %222 = tpu.matmul %220, %221, %cst_103 {dimension_numbers = #tpu.dot_dimension_numbers<[1], [0], [0], [1], [0, 0, 1, 1], [], []>} : vector<64x32xbf16>, vector<32x32xbf16>, vector<64x32xf32> -> vector<64x32xf32>
    %c1440 = arith.constant 1440 : index
    %c0_104 = arith.constant 0 : index
    %223 = vector.load %arg2[%c1440, %c0_104] : memref<1568x128xbf16, #tpu.memory_space<vmem>>, vector<1x32xbf16>
    %224 = arith.extf %223 : vector<1x32xbf16> to vector<1x32xf32>
    %225 = vector.broadcast %224 : vector<1x32xf32> to vector<64x32xf32>
    %226 = arith.addf %222, %225 : vector<64x32xf32>
    %227 = arith.truncf %226 : vector<64x32xf32> to vector<64x32xbf16>
    %c1376 = arith.constant 1376 : index
    %c0_105 = arith.constant 0 : index
    %228 = vector.load %arg2[%c1376, %c0_105] : memref<1568x128xbf16, #tpu.memory_space<vmem>>, vector<32x32xbf16>
    %cst_106 = arith.constant dense<0.000000e+00> : vector<64x32xf32>
    %229 = tpu.matmul %220, %228, %cst_106 {dimension_numbers = #tpu.dot_dimension_numbers<[1], [0], [0], [1], [0, 0, 1, 1], [], []>} : vector<64x32xbf16>, vector<32x32xbf16>, vector<64x32xf32> -> vector<64x32xf32>
    %c1456 = arith.constant 1456 : index
    %c0_107 = arith.constant 0 : index
    %230 = vector.load %arg2[%c1456, %c0_107] : memref<1568x128xbf16, #tpu.memory_space<vmem>>, vector<1x32xbf16>
    %231 = arith.extf %230 : vector<1x32xbf16> to vector<1x32xf32>
    %232 = vector.broadcast %231 : vector<1x32xf32> to vector<64x32xf32>
    %233 = arith.addf %229, %232 : vector<64x32xf32>
    %234 = arith.truncf %233 : vector<64x32xf32> to vector<64x32xbf16>
    %c1408 = arith.constant 1408 : index
    %c0_108 = arith.constant 0 : index
    %235 = vector.load %arg2[%c1408, %c0_108] : memref<1568x128xbf16, #tpu.memory_space<vmem>>, vector<32x32xbf16>
    %cst_109 = arith.constant dense<0.000000e+00> : vector<64x32xf32>
    %236 = tpu.matmul %220, %235, %cst_109 {dimension_numbers = #tpu.dot_dimension_numbers<[1], [0], [0], [1], [0, 0, 1, 1], [], []>} : vector<64x32xbf16>, vector<32x32xbf16>, vector<64x32xf32> -> vector<64x32xf32>
    %c1472 = arith.constant 1472 : index
    %c0_110 = arith.constant 0 : index
    %237 = vector.load %arg2[%c1472, %c0_110] : memref<1568x128xbf16, #tpu.memory_space<vmem>>, vector<1x32xbf16>
    %238 = arith.extf %237 : vector<1x32xbf16> to vector<1x32xf32>
    %239 = vector.broadcast %238 : vector<1x32xf32> to vector<64x32xf32>
    %240 = arith.addf %236, %239 : vector<64x32xf32>
    %241 = arith.truncf %240 : vector<64x32xf32> to vector<64x32xbf16>
    %cst_111 = arith.constant dense<0.000000e+00> : vector<64x64xf32>
    %242 = tpu.matmul %227, %234, %cst_111 {dimension_numbers = #tpu.dot_dimension_numbers<[1], [1], [0], [0], [0, 0, 1, 0], [], []>} : vector<64x32xbf16>, vector<64x32xbf16>, vector<64x64xf32> -> vector<64x64xf32>
    %cst_112 = arith.constant 0.176776692 : f32
    %243 = vector.broadcast %cst_112 : f32 to vector<64x64xf32>
    %244 = arith.mulf %242, %243 : vector<64x64xf32>
    %c96 = arith.constant 96 : index
    %c0_113 = arith.constant 0 : index
    %245 = vector.load %arg2[%c96, %c0_113] : memref<1568x128xbf16, #tpu.memory_space<vmem>>, vector<64x64xbf16>
    %246 = arith.extf %245 : vector<64x64xbf16> to vector<64x64xf32>
    %247 = arith.addf %244, %246 : vector<64x64xf32>
    %cst_114 = arith.constant dense<0xFF800000> : vector<64xf32>
    %248 = vector.multi_reduction <maximumf>, %247, %cst_114 [1] : vector<64x64xf32> to vector<64xf32>
    %249 = vector.shape_cast %248 : vector<64xf32> to vector<64x1xf32>
    %250 = vector.broadcast %249 : vector<64x1xf32> to vector<64x64xf32>
    %251 = arith.subf %247, %250 : vector<64x64xf32>
    %252 = math.exp %251 : vector<64x64xf32>
    %cst_115 = arith.constant dense<0.000000e+00> : vector<64xf32>
    %253 = vector.multi_reduction <add>, %252, %cst_115 [1] : vector<64x64xf32> to vector<64xf32>
    %254 = vector.shape_cast %253 : vector<64xf32> to vector<64x1xf32>
    %255 = vector.broadcast %254 : vector<64x1xf32> to vector<64x64xf32>
    %256 = arith.divf %252, %255 : vector<64x64xf32>
    %257 = arith.truncf %256 : vector<64x64xf32> to vector<64x64xbf16>
    %cst_116 = arith.constant dense<0.000000e+00> : vector<64x32xf32>
    %258 = tpu.matmul %257, %241, %cst_116 {dimension_numbers = #tpu.dot_dimension_numbers<[1], [0], [0], [1], [0, 0, 1, 1], [], []>} : vector<64x64xbf16>, vector<64x32xbf16>, vector<64x32xf32> -> vector<64x32xf32>
    %259 = arith.truncf %258 : vector<64x32xf32> to vector<64x32xbf16>
    %c1488 = arith.constant 1488 : index
    %c0_117 = arith.constant 0 : index
    %260 = vector.load %arg2[%c1488, %c0_117] : memref<1568x128xbf16, #tpu.memory_space<vmem>>, vector<32x1xbf16>
    %cst_118 = arith.constant dense<0.000000e+00> : vector<64x1xf32>
    %261 = tpu.matmul %259, %260, %cst_118 {dimension_numbers = #tpu.dot_dimension_numbers<[1], [0], [0], [1], [0, 0, 1, 1], [], []>} : vector<64x32xbf16>, vector<32x1xbf16>, vector<64x1xf32> -> vector<64x1xf32>
    %c1520 = arith.constant 1520 : index
    %c0_119 = arith.constant 0 : index
    %262 = vector.load %arg2[%c1520, %c0_119] : memref<1568x128xbf16, #tpu.memory_space<vmem>>, vector<1x1xbf16>
    %263 = arith.extf %262 : vector<1x1xbf16> to vector<1x1xf32>
    %264 = vector.broadcast %263 : vector<1x1xf32> to vector<64x1xf32>
    %265 = arith.addf %261, %264 : vector<64x1xf32>
    %266 = arith.truncf %265 : vector<64x1xf32> to vector<64x1xbf16>
    %c1536 = arith.constant 1536 : index
    %c0_120 = arith.constant 0 : index
    %267 = vector.load %arg2[%c1536, %c0_120] : memref<1568x128xbf16, #tpu.memory_space<vmem>>, vector<8x64xbf16>
    %cst_121 = arith.constant dense<0.000000e+00> : vector<8x1xf32>
    %268 = tpu.matmul %267, %266, %cst_121 {dimension_numbers = #tpu.dot_dimension_numbers<[1], [0], [0], [1], [0, 0, 1, 1], [], []>} : vector<8x64xbf16>, vector<64x1xbf16>, vector<8x1xf32> -> vector<8x1xf32>
    %c1552 = arith.constant 1552 : index
    %c0_122 = arith.constant 0 : index
    %269 = vector.load %arg2[%c1552, %c0_122] : memref<1568x128xbf16, #tpu.memory_space<vmem>>, vector<8x1xbf16>
    %270 = arith.extf %269 : vector<8x1xbf16> to vector<8x1xf32>
    %271 = arith.addf %268, %270 : vector<8x1xf32>
    %c0_123 = arith.constant 0 : index
    %c0_124 = arith.constant 0 : index
    %272 = vector.load %arg3[%c0_123, %c0_124] : memref<8x1xf32, #tpu.memory_space<vmem>>, vector<8x1xf32>
    tpu.vector_store %arg3[%c0_123, %c0_124], %271 {strides = array<i32>} : memref<8x1xf32, #tpu.memory_space<vmem>>, vector<8x1xf32>,
    return
  }
}

</mosaic_0001>

<llo_original>
// kernel: squeeze.5
$region0: #{squeeze.5}
  %s0 = inlined_call_operand.vmem [shape: f32[8], index: 0, kind: input, shape index: {}]
  %s1 = inlined_call_operand.vmem [shape: f32[2,4], index: 1, kind: output, shape index: {}]
  $region1: #{squeeze.5} parent=0
    #allocation0 [shape = 'u8[4096]{0}', space=vmem, size = 0x1000, scoped, tag = 'scoped mem for output reshape']
    #allocation1 [shape = 'u8[4096]{0}', space=vmem, size = 0x1000, scoped, tag = 'scoped mem for input reshape']
    %s3 = ssub.s32 2, 1
    %v4 = vld [vmem:[%s0] sm:%s3]
    %5 = vst [vmem:[#allocation1] sm:%s3] %v4
    %v6 = vld [vmem:[#allocation1] sm:$0x1]
    %vm7 = vcmask 31744
    %8 = vst.msk [vmem:[#allocation0] sm:$0x1] %vm7, %v6
    %v9 = vld [vmem:[#allocation1] sm:$0x1]
    %10 = vrot.lane.b32.xlu0 %v9, 124
    %v11 = vpop.permute.xlu0 %10
    %vm12 = vcmask 31744
    %s13 = scalar_lea.vmem [#allocation0], 1
    %14 = vst.msk [vmem:[%s13] sm:$0x1] %vm12, %v11
    %s16 = ssub.s32 4, 1
    %v17 = vld [vmem:[#allocation0] sm:%s16]
    %s19 = ssub.s32 4, 1
    %20 = vst [vmem:[%s1] sm:%s19] %v17

// kernel: forward.1
$region0: #{forward.1}
  #allocation0 [shape = 'u32[]', space=smem, size = 0x4, offset = 0x4, fixed_abs, tag = 'smem constant byte address 0x4 - core index']
  #allocation1 [shape = 'u32[72,128]{1,0:T(1,128)}', space=vmem, size = 0x9000, scoped, tag = 'internal scratch']
  %s0 = inlined_call_operand.vmem [shape: bf16[16,32], index: 0, kind: input, shape index: {}]
  %s1 = inlined_call_operand.vmem [shape: bf16[16,32], index: 1, kind: input, shape index: {}]
  %s2 = inlined_call_operand.hbm [shape: bf16[1568,128], index: 2, kind: input, shape index: {}]
  %s3 = inlined_call_operand.vmem [shape: f32[8,1], index: 3, kind: output, shape index: {}]
  %s4 = sld [smem:[#allocation0]]
  $region26: #{forward.1} parent=0
    _
  %s6 = ssub.s32 1, %s4
  %s7 = scalar_select 0, %s6, %s4
  $region1: #{forward.1} parent=0
    #allocation2 [shape = 'u8[401408]{0}', space=vmem, size = 0x62000, scoped, tag = 'input window, operand 2, single buffered']
    #allocation3 [shape = 's32[1]{0}', space=sflag, size = 0x4, scoped, tag = 'scoped memory for forward.1']
    %8 = vsyncpa [#allocation3], 0
    // Predicated region
    $region2: #{forward.1} parent=1 // pred_check
      _
    $region3: #{forward.1} parent=1 // pred_check_branch
      %10 = sbr.rel (0) target = $region5
    $region4: #{forward.1} parent=1 // pred_region
      _
    $region5: #{forward.1} parent=1 // pred_fallthru
      _
    // Predicated region
    $region6: #{forward.1} parent=1 // pred_check
      _
    $region7: #{forward.1} parent=1 // pred_check_branch
      %12 = sbr.rel (0) target = $region9
    $region8: #{forward.1} parent=1 // pred_region
      _
    $region9: #{forward.1} parent=1 // pred_fallthru
      _
    // Predicated region
    $region10: #{forward.1} parent=1 // pred_check
      _
    $region11: #{forward.1} parent=1 // pred_check_branch
      %14 = sbr.rel (0) target = $region13
    $region12: #{forward.1} parent=1 // pred_region
      %16 = vsyncadd [#allocation3], 0
      %s17 = sshll.u32 %s2, 4
      %s18 = int_to_ptr.hbm [resolvable:$true] %s17
      %s19 = sshll.u32 [#allocation2], 4
      %s20 = int_to_ptr.vmem [resolvable:$true] %s19
      %25 = dma.hbm_to_vmem [thread:$0]  %s18, 12544, %s20, [#allocation3], 64, 64, 4
    $region13: #{forward.1} parent=1 // pred_fallthru
      _
    // Predicated region
    $region14: #{forward.1} parent=1 // pred_check
      _
    $region15: #{forward.1} parent=1 // pred_check_branch
      %27 = sbr.rel (0) target = $region17
    $region16: #{forward.1} parent=1 // pred_region
      %29 = dma.done [#allocation3], 12544
    $region17: #{forward.1} parent=1 // pred_fallthru
      _
    %v31 = vld [vmem:[#allocation2] sm:$0xf]
    %v32 = vld [vmem:[#allocation2 + $0x4] sm:$0xf]
    %v33 = vld [vmem:[#allocation2 + $0x8] sm:$0xf]
    %v34 = vld [vmem:[#allocation2 + $0xc] sm:$0xf]
    %v35 = vld [vmem:[#allocation2 + $0x10] sm:$0xf]
    %v36 = vld [vmem:[#allocation2 + $0x14] sm:$0xf]
    %v37 = vld [vmem:[#allocation2 + $0x18] sm:$0xf]
    %v38 = vld [vmem:[#allocation2 + $0x1c] sm:$0xf]
    %v39 = vld [vmem:[%s0] sm:$0xf]
    %v40 = vld [vmem:[%s0 + $0x4] sm:$0xf]
    %v43 = vunpack.c.l.b16 %v39
    %v44 = vunpack.c.l.b16 %v40
    %v45 = vpack.c.b16 %v44, %v43
    %v50 = vunpack.c.l.b16 %v31
    %v51 = vunpack.c.l.b16 %v32
    %v52 = vunpack.c.l.b16 %v33
    %v53 = vunpack.c.l.b16 %v34
    %v54 = vpack.c.b16 %v51, %v50
    %v55 = vpack.c.b16 %v53, %v52
    %vm58 = vcmask 261120
    %v60 = vsel %vm58, %v45, 0
    %62 = vmatpush.bf16.msra.mxu0 0
    %63 = vmatpush.bf16.msra.mxu0 0
    %64 = vmatpush.bf16.msra.mxu0 0
    %65 = vmatpush.bf16.msra.mxu0 0
    %66 = vmatpush.bf16.msra.mxu0 0
    %67 = vmatpush.bf16.msra.mxu0 0
    %68 = vmatpush.bf16.msra.mxu0 %v55
    %69 = vmatpush.bf16.msra.mxu0 %v54
    %70 = vmatmul.bf16.gmra.mxu0 %v60
    %v71 = vpop.f32.mrf.mxu0
    %v72 = vadd.f32 0.0, %v71
    %v73 = vpop.f32.mrf.mxu0
    %v74 = vadd.f32 0.0, %v73
    %75 = vdwg.mxu0
    %v76 = vpack.c.bf16 %v74, %v72
    %v77 = vld [vmem:[#allocation2 + $0x50] sm:$0xf]
    %v78 = vld [vmem:[#allocation2 + $0x54] sm:$0xf]
    %v79 = vld [vmem:[#allocation2 + $0x58] sm:$0xf]
    %v80 = vld [vmem:[#allocation2 + $0x5c] sm:$0xf]
    %v81 = vld [vmem:[#allocation2 + $0x60] sm:$0xf]
    %v82 = vld [vmem:[#allocation2 + $0x64] sm:$0xf]
    %v83 = vld [vmem:[#allocation2 + $0x68] sm:$0xf]
    %v84 = vld [vmem:[#allocation2 + $0x6c] sm:$0xf]
    %v89 = vunpack.c.l.b16 %v81
    %v90 = vunpack.c.l.b16 %v82
    %v91 = vunpack.c.l.b16 %v83
    %v92 = vunpack.c.l.b16 %v84
    %v93 = vpack.c.b16 %v90, %v89
    %v94 = vpack.c.b16 %v92, %v91
    %vm95 = vcmask 130048
    %v97 = vsel %vm95, %v93, 0
    %v100 = vsel %vm95, %v94, 0
    %102 = vmatpush.bf16.msra.mxu0 0
    %103 = vmatpush.bf16.msra.mxu0 0
    %104 = vmatpush.bf16.msra.mxu0 0
    %105 = vmatpush.bf16.msra.mxu0 0
    %106 = vmatpush.bf16.msra.mxu0 0
    %107 = vmatpush.bf16.msra.mxu0 0
    %108 = vmatpush.bf16.msra.mxu0 0
    %109 = vmatpush.bf16.msra.mxu0 %v76
    %110 = vmatmul.bf16.gmra.mxu0 %v97
    %v111 = vpop.f32.mrf.mxu0
    %v112 = vadd.f32 0.0, %v111
    %v113 = vpop.f32.mrf.mxu0
    %v114 = vadd.f32 0.0, %v113
    %115 = vmatmul.bf16.gmra.mxu0 %v100
    %v116 = vpop.f32.mrf.mxu0
    %v117 = vadd.f32 0.0, %v116
    %v118 = vpop.f32.mrf.mxu0
    %v119 = vadd.f32 0.0, %v118
    %120 = vdwg.mxu0
    %v125 = vunpack.c.l.b16 %v77
    %v126 = vunpack.c.l.b16 %v78
    %v127 = vunpack.c.l.b16 %v79
    %v128 = vunpack.c.l.b16 %v80
    %v129 = vpack.c.b16 %v126, %v125
    %v130 = vpack.c.b16 %v128, %v127
    %v133 = vsel %vm95, %v129, 0
    %v136 = vsel %vm95, %v130, 0
    %138 = vmatpush.bf16.msra.mxu0 0
    %139 = vmatpush.bf16.msra.mxu0 0
    %140 = vmatpush.bf16.msra.mxu0 0
    %141 = vmatpush.bf16.msra.mxu0 0
    %142 = vmatpush.bf16.msra.mxu0 0
    %143 = vmatpush.bf16.msra.mxu0 0
    %144 = vmatpush.bf16.msra.mxu0 0
    %145 = vmatpush.bf16.msra.mxu0 %v45
    %146 = vmatmul.bf16.gmra.mxu0 %v133
    %v147 = vpop.f32.mrf.mxu0
    %v148 = vadd.f32 %v112, %v147
    %v149 = vpop.f32.mrf.mxu0
    %v150 = vadd.f32 %v114, %v149
    %151 = vmatmul.bf16.gmra.mxu0 %v136
    %v152 = vpop.f32.mrf.mxu0
    %v153 = vadd.f32 %v117, %v152
    %v154 = vpop.f32.mrf.mxu0
    %v155 = vadd.f32 %v119, %v154
    %156 = vdwg.mxu0
    %v157 = vld [vmem:[#allocation2 + $0x70] sm:$0xf]
    %v158 = vld [vmem:[#allocation2 + $0x74] sm:$0xf]
    %v159 = vld [vmem:[#allocation2 + $0x78] sm:$0xf]
    %v160 = vld [vmem:[#allocation2 + $0x7c] sm:$0xf]
    %v161 = vunpack.c.l.bf16 %v157
    %v162 = vunpack.c.l.bf16 %v158
    %v163 = vunpack.c.l.bf16 %v159
    %v164 = vunpack.c.l.bf16 %v160
    %166 = vset.pattern.permute.xlu0 0
    %167 = vperm.xlu0 %166, %v161
    %v168 = vpop.permute.xlu0 %167
    %171 = vset.pattern.permute.xlu0 0
    %172 = vperm.xlu0 %171, %v162
    %v173 = vpop.permute.xlu0 %172
    %176 = vset.pattern.permute.xlu0 0
    %177 = vperm.xlu0 %176, %v163
    %v178 = vpop.permute.xlu0 %177
    %181 = vset.pattern.permute.xlu0 0
    %182 = vperm.xlu0 %181, %v164
    %v183 = vpop.permute.xlu0 %182
    %v185 = vadd.f32 %v148, %v168
    %v186 = vadd.f32 %v150, %v173
    %v187 = vadd.f32 %v153, %v178
    %v188 = vadd.f32 %v155, %v183
    %v189 = vmax.f32 %v185, 0.0
    %v190 = vmax.f32 %v186, 0.0
    %v191 = vmax.f32 %v187, 0.0
    %v192 = vmax.f32 %v188, 0.0
    %v193 = vpack.c.bf16 %v190, %v189
    %v194 = vpack.c.bf16 %v192, %v191
    %v196 = vsel %vm58, %v193, 0
    %v199 = vsel %vm58, %v194, 0
    %201 = vmatpush.bf16.msra.mxu0 0
    %202 = vmatpush.bf16.msra.mxu0 0
    %203 = vmatpush.bf16.msra.mxu0 0
    %204 = vmatpush.bf16.msra.mxu0 0
    %205 = vmatpush.bf16.msra.mxu0 0
    %206 = vmatpush.bf16.msra.mxu0 0
    %207 = vmatpush.bf16.msra.mxu0 %v55
    %208 = vmatpush.bf16.msra.mxu0 %v54
    %209 = vmatmul.bf16.gmra.mxu0 %v196
    %v210 = vpop.f32.mrf.mxu0
    %v211 = vadd.f32 0.0, %v210
    %v212 = vpop.f32.mrf.mxu0
    %v213 = vadd.f32 0.0, %v212
    %214 = vmatmul.bf16.gmra.mxu0 %v199
    %v215 = vpop.f32.mrf.mxu0
    %v216 = vadd.f32 0.0, %v215
    %v217 = vpop.f32.mrf.mxu0
    %v218 = vadd.f32 0.0, %v217
    %219 = vdwg.mxu0
    %v220 = vpack.c.bf16 %v213, %v211
    %v221 = vpack.c.bf16 %v218, %v216
    %v222 = vld [vmem:[#allocation2 + $0x80] sm:$0xf]
    %v223 = vld [vmem:[#allocation2 + $0x84] sm:$0xf]
    %v224 = vld [vmem:[#allocation2 + $0x88] sm:$0xf]
    %v225 = vld [vmem:[#allocation2 + $0x8c] sm:$0xf]
    %v226 = vld [vmem:[#allocation2 + $0x90] sm:$0xf]
    %v227 = vld [vmem:[#allocation2 + $0x94] sm:$0xf]
    %v228 = vld [vmem:[#allocation2 + $0x98] sm:$0xf]
    %v229 = vld [vmem:[#allocation2 + $0x9c] sm:$0xf]
    %v234 = vunpack.c.l.b16 %v226
    %v235 = vunpack.c.l.b16 %v227
    %v236 = vunpack.c.l.b16 %v228
    %v237 = vunpack.c.l.b16 %v229
    %v238 = vpack.c.b16 %v235, %v234
    %v239 = vpack.c.b16 %v237, %v236
    %v241 = vsel %vm58, %v238, 0
    %v244 = vsel %vm58, %v239, 0
    %246 = vmatpush.bf16.msra.mxu0 0
    %247 = vmatpush.bf16.msra.mxu0 0
    %248 = vmatpush.bf16.msra.mxu0 0
    %249 = vmatpush.bf16.msra.mxu0 0
    %250 = vmatpush.bf16.msra.mxu0 0
    %251 = vmatpush.bf16.msra.mxu0 0
    %252 = vmatpush.bf16.msra.mxu0 %v221
    %253 = vmatpush.bf16.msra.mxu0 %v220
    %254 = vmatmul.bf16.gmra.mxu0 %v241
    %v255 = vpop.f32.mrf.mxu0
    %v256 = vadd.f32 0.0, %v255
    %v257 = vpop.f32.mrf.mxu0
    %v258 = vadd.f32 0.0, %v257
    %259 = vmatmul.bf16.gmra.mxu0 %v244
    %v260 = vpop.f32.mrf.mxu0
    %v261 = vadd.f32 0.0, %v260
    %v262 = vpop.f32.mrf.mxu0
    %v263 = vadd.f32 0.0, %v262
    %264 = vdwg.mxu0
    %v269 = vunpack.c.l.b16 %v222
    %v270 = vunpack.c.l.b16 %v223
    %v271 = vunpack.c.l.b16 %v224
    %v272 = vunpack.c.l.b16 %v225
    %v273 = vpack.c.b16 %v270, %v269
    %v274 = vpack.c.b16 %v272, %v271
    %v276 = vsel %vm58, %v273, 0
    %v279 = vsel %vm58, %v274, 0
    %281 = vmatpush.bf16.msra.mxu0 0
    %282 = vmatpush.bf16.msra.mxu0 0
    %283 = vmatpush.bf16.msra.mxu0 0
    %284 = vmatpush.bf16.msra.mxu0 0
    %285 = vmatpush.bf16.msra.mxu0 0
    %286 = vmatpush.bf16.msra.mxu0 0
    %287 = vmatpush.bf16.msra.mxu0 %v194
    %288 = vmatpush.bf16.msra.mxu0 %v193
    %289 = vmatmul.bf16.gmra.mxu0 %v276
    %v290 = vpop.f32.mrf.mxu0
    %v291 = vadd.f32 %v256, %v290
    %v292 = vpop.f32.mrf.mxu0
    %v293 = vadd.f32 %v258, %v292
    %294 = vmatmul.bf16.gmra.mxu0 %v279
    %v295 = vpop.f32.mrf.mxu0
    %v296 = vadd.f32 %v261, %v295
    %v297 = vpop.f32.mrf.mxu0
    %v298 = vadd.f32 %v263, %v297
    %299 = vdwg.mxu0
    %v300 = vld [vmem:[#allocation2 + $0xa0] sm:$0xf]
    %v301 = vld [vmem:[#allocation2 + $0xa4] sm:$0xf]
    %v302 = vld [vmem:[#allocation2 + $0xa8] sm:$0xf]
    %v303 = vld [vmem:[#allocation2 + $0xac] sm:$0xf]
    %v304 = vunpack.c.l.bf16 %v300
    %v305 = vunpack.c.l.bf16 %v301
    %v306 = vunpack.c.l.bf16 %v302
    %v307 = vunpack.c.l.bf16 %v303
    %309 = vset.pattern.permute.xlu0 0
    %310 = vperm.xlu0 %309, %v304
    %v311 = vpop.permute.xlu0 %310
    %314 = vset.pattern.permute.xlu0 0
    %315 = vperm.xlu0 %314, %v305
    %v316 = vpop.permute.xlu0 %315
    %319 = vset.pattern.permute.xlu0 0
    %320 = vperm.xlu0 %319, %v306
    %v321 = vpop.permute.xlu0 %320
    %324 = vset.pattern.permute.xlu0 0
    %325 = vperm.xlu0 %324, %v307
    %v326 = vpop.permute.xlu0 %325
    %v328 = vadd.f32 %v291, %v311
    %v329 = vadd.f32 %v293, %v316
    %v330 = vadd.f32 %v296, %v321
    %v331 = vadd.f32 %v298, %v326
    %v332 = vmax.f32 %v328, 0.0
    %v333 = vmax.f32 %v329, 0.0
    %v334 = vmax.f32 %v330, 0.0
    %v335 = vmax.f32 %v331, 0.0
    %v336 = vld [vmem:[#allocation2 + $0xb0] sm:$0xf]
    %v337 = vld [vmem:[#allocation2 + $0xb4] sm:$0xf]
    %v338 = vld [vmem:[#allocation2 + $0xb8] sm:$0xf]
    %v339 = vld [vmem:[#allocation2 + $0xbc] sm:$0xf]
    %v340 = vld [vmem:[#allocation2 + $0xc0] sm:$0xf]
    %v341 = vld [vmem:[#allocation2 + $0xc4] sm:$0xf]
    %v342 = vld [vmem:[#allocation2 + $0xc8] sm:$0xf]
    %v343 = vld [vmem:[#allocation2 + $0xcc] sm:$0xf]
    %v344 = vunpack.c.l.bf16 %v340
    %v345 = vunpack.c.l.bf16 %v341
    %v346 = vunpack.c.l.bf16 %v342
    %v347 = vunpack.c.l.bf16 %v343
    %349 = vset.pattern.permute.xlu0 0
    %350 = vperm.xlu0 %349, %v344
    %v351 = vpop.permute.xlu0 %350
    %354 = vset.pattern.permute.xlu0 0
    %355 = vperm.xlu0 %354, %v345
    %v356 = vpop.permute.xlu0 %355
    %359 = vset.pattern.permute.xlu0 0
    %360 = vperm.xlu0 %359, %v346
    %v361 = vpop.permute.xlu0 %360
    %364 = vset.pattern.permute.xlu0 0
    %365 = vperm.xlu0 %364, %v347
    %v366 = vpop.permute.xlu0 %365
    %v372 = vunpack.c.l.b16 %v336
    %v373 = vunpack.c.l.b16 %v337
    %v374 = vunpack.c.l.b16 %v338
    %v375 = vunpack.c.l.b16 %v339
    %v376 = vpack.c.b16 %v373, %v372
    %v377 = vpack.c.b16 %v375, %v374
    %v379 = vsel %vm95, %v376, 0
    %v382 = vsel %vm95, %v377, 0
    %384 = vmatpush.bf16.msra.mxu0 0
    %385 = vmatpush.bf16.msra.mxu0 0
    %386 = vmatpush.bf16.msra.mxu0 0
    %387 = vmatpush.bf16.msra.mxu0 0
    %388 = vmatpush.bf16.msra.mxu0 0
    %389 = vmatpush.bf16.msra.mxu0 0
    %390 = vmatpush.bf16.msra.mxu0 0
    %391 = vmatpush.bf16.msra.mxu0 %v45
    %392 = vmatmul.bf16.gmra.mxu0 %v379
    %v393 = vpop.f32.mrf.mxu0
    %v394 = vadd.f32 %v351, %v393
    %v395 = vpop.f32.mrf.mxu0
    %v396 = vadd.f32 %v356, %v395
    %397 = vmatmul.bf16.gmra.mxu0 %v382
    %v398 = vpop.f32.mrf.mxu0
    %v399 = vadd.f32 %v361, %v398
    %v400 = vpop.f32.mrf.mxu0
    %v401 = vadd.f32 %v366, %v400
    %402 = vdwg.mxu0
    %v403 = vadd.f32 %v332, %v394
    %v404 = vadd.f32 %v333, %v396
    %v405 = vadd.f32 %v334, %v399
    %v406 = vadd.f32 %v335, %v401
    %v407 = vmax.f32 %v403, 0.0
    %v408 = vmax.f32 %v404, 0.0
    %v409 = vmax.f32 %v405, 0.0
    %v410 = vmax.f32 %v406, 0.0
    %v411 = vpack.c.bf16 %v407, %v407
    %v412 = vpack.c.bf16 %v408, %v408
    %v413 = vpack.c.bf16 %v409, %v409
    %v414 = vpack.c.bf16 %v410, %v410
    %v419 = vunpack.c.l.b16 %v411
    %v420 = vunpack.c.l.b16 %v412
    %v421 = vunpack.c.l.b16 %v413
    %v422 = vunpack.c.l.b16 %v414
    %v423 = vpack.c.b16 %v420, %v419
    %v424 = vpack.c.b16 %v422, %v421
    %v429 = vunpack.c.l.b16 %v35
    %v430 = vunpack.c.l.b16 %v36
    %v431 = vunpack.c.l.b16 %v37
    %v432 = vunpack.c.l.b16 %v38
    %v433 = vpack.c.b16 %v430, %v429
    %v434 = vpack.c.b16 %v432, %v431
    %v438 = vsel %vm58, %v423, 0
    %v441 = vsel %vm58, %v424, 0
    %443 = vmatpush.bf16.msra.mxu0 0
    %444 = vmatpush.bf16.msra.mxu0 0
    %445 = vmatpush.bf16.msra.mxu0 0
    %446 = vmatpush.bf16.msra.mxu0 0
    %447 = vmatpush.bf16.msra.mxu0 0
    %448 = vmatpush.bf16.msra.mxu0 0
    %449 = vmatpush.bf16.msra.mxu0 %v434
    %450 = vmatpush.bf16.msra.mxu0 %v433
    %451 = vmatmul.bf16.gmra.mxu0 %v438
    %v452 = vpop.f32.mrf.mxu0
    %v453 = vadd.f32 0.0, %v452
    %v454 = vpop.f32.mrf.mxu0
    %v455 = vadd.f32 0.0, %v454
    %456 = vmatmul.bf16.gmra.mxu0 %v441
    %v457 = vpop.f32.mrf.mxu0
    %v458 = vadd.f32 0.0, %v457
    %v459 = vpop.f32.mrf.mxu0
    %v460 = vadd.f32 0.0, %v459
    %461 = vdwg.mxu0
    %v462 = vpack.c.bf16 %v455, %v453
    %v463 = vpack.c.bf16 %v460, %v458
    %v464 = vld [vmem:[#allocation2 + $0xd0] sm:$0xf]
    %v465 = vld [vmem:[#allocation2 + $0xd4] sm:$0xf]
    %v466 = vld [vmem:[#allocation2 + $0xd8] sm:$0xf]
    %v467 = vld [vmem:[#allocation2 + $0xdc] sm:$0xf]
    %v468 = vld [vmem:[#allocation2 + $0xe0] sm:$0xf]
    %v469 = vld [vmem:[#allocation2 + $0xe4] sm:$0xf]
    %v470 = vld [vmem:[#allocation2 + $0xe8] sm:$0xf]
    %v471 = vld [vmem:[#allocation2 + $0xec] sm:$0xf]
    %v476 = vunpack.c.l.b16 %v468
    %v477 = vunpack.c.l.b16 %v469
    %v478 = vunpack.c.l.b16 %v470
    %v479 = vunpack.c.l.b16 %v471
    %v480 = vpack.c.b16 %v477, %v476
    %v481 = vpack.c.b16 %v479, %v478
    %v483 = vsel %vm58, %v480, 0
    %v486 = vsel %vm58, %v481, 0
    %488 = vmatpush.bf16.msra.mxu0 0
    %489 = vmatpush.bf16.msra.mxu0 0
    %490 = vmatpush.bf16.msra.mxu0 0
    %491 = vmatpush.bf16.msra.mxu0 0
    %492 = vmatpush.bf16.msra.mxu0 0
    %493 = vmatpush.bf16.msra.mxu0 0
    %494 = vmatpush.bf16.msra.mxu0 %v463
    %495 = vmatpush.bf16.msra.mxu0 %v462
    %496 = vmatmul.bf16.gmra.mxu0 %v483
    %v497 = vpop.f32.mrf.mxu0
    %v498 = vadd.f32 0.0, %v497
    %v499 = vpop.f32.mrf.mxu0
    %v500 = vadd.f32 0.0, %v499
    %501 = vmatmul.bf16.gmra.mxu0 %v486
    %v502 = vpop.f32.mrf.mxu0
    %v503 = vadd.f32 0.0, %v502
    %v504 = vpop.f32.mrf.mxu0
    %v505 = vadd.f32 0.0, %v504
    %506 = vdwg.mxu0
    %v511 = vunpack.c.l.b16 %v464
    %v512 = vunpack.c.l.b16 %v465
    %v513 = vunpack.c.l.b16 %v466
    %v514 = vunpack.c.l.b16 %v467
    %v515 = vpack.c.b16 %v512, %v511
    %v516 = vpack.c.b16 %v514, %v513
    %v520 = vsel %vm58, %v515, 0
    %v523 = vsel %vm58, %v516, 0
    %525 = vmatpush.bf16.msra.mxu0 0
    %526 = vmatpush.bf16.msra.mxu0 0
    %527 = vmatpush.bf16.msra.mxu0 0
    %528 = vmatpush.bf16.msra.mxu0 0
    %529 = vmatpush.bf16.msra.mxu0 0
    %530 = vmatpush.bf16.msra.mxu0 0
    %531 = vmatpush.bf16.msra.mxu0 %v424
    %532 = vmatpush.bf16.msra.mxu0 %v423
    %533 = vmatmul.bf16.gmra.mxu0 %v520
    %v534 = vpop.f32.mrf.mxu0
    %v535 = vadd.f32 %v498, %v534
    %v536 = vpop.f32.mrf.mxu0
    %v537 = vadd.f32 %v500, %v536
    %538 = vmatmul.bf16.gmra.mxu0 %v523
    %v539 = vpop.f32.mrf.mxu0
    %v540 = vadd.f32 %v503, %v539
    %v541 = vpop.f32.mrf.mxu0
    %v542 = vadd.f32 %v505, %v541
    %543 = vdwg.mxu0
    %v544 = vld [vmem:[#allocation2 + $0xf0] sm:$0xf]
    %v545 = vld [vmem:[#allocation2 + $0xf4] sm:$0xf]
    %v546 = vld [vmem:[#allocation2 + $0xf8] sm:$0xf]
    %v547 = vld [vmem:[#allocation2 + $0xfc] sm:$0xf]
    %v548 = vunpack.c.l.bf16 %v544
    %v549 = vunpack.c.l.bf16 %v545
    %v550 = vunpack.c.l.bf16 %v546
    %v551 = vunpack.c.l.bf16 %v547
    %553 = vset.pattern.permute.xlu0 0
    %554 = vperm.xlu0 %553, %v548
    %v555 = vpop.permute.xlu0 %554
    %558 = vset.pattern.permute.xlu0 0
    %559 = vperm.xlu0 %558, %v549
    %v560 = vpop.permute.xlu0 %559
    %563 = vset.pattern.permute.xlu0 0
    %564 = vperm.xlu0 %563, %v550
    %v565 = vpop.permute.xlu0 %564
    %568 = vset.pattern.permute.xlu0 0
    %569 = vperm.xlu0 %568, %v551
    %v570 = vpop.permute.xlu0 %569
    %v572 = vadd.f32 %v535, %v555
    %v573 = vadd.f32 %v537, %v560
    %v574 = vadd.f32 %v540, %v565
    %v575 = vadd.f32 %v542, %v570
    %v576 = vmax.f32 %v572, 0.0
    %v577 = vmax.f32 %v573, 0.0
    %v578 = vmax.f32 %v574, 0.0
    %v579 = vmax.f32 %v575, 0.0
    %v580 = vpack.c.bf16 %v577, %v576
    %v581 = vpack.c.bf16 %v579, %v578
    %v583 = vsel %vm58, %v580, 0
    %v586 = vsel %vm58, %v581, 0
    %588 = vmatpush.bf16.msra.mxu0 0
    %589 = vmatpush.bf16.msra.mxu0 0
    %590 = vmatpush.bf16.msra.mxu0 0
    %591 = vmatpush.bf16.msra.mxu0 0
    %592 = vmatpush.bf16.msra.mxu0 0
    %593 = vmatpush.bf16.msra.mxu0 0
    %594 = vmatpush.bf16.msra.mxu0 %v434
    %595 = vmatpush.bf16.msra.mxu0 %v433
    %596 = vmatmul.bf16.gmra.mxu0 %v583
    %v597 = vpop.f32.mrf.mxu0
    %v598 = vadd.f32 0.0, %v597
    %v599 = vpop.f32.mrf.mxu0
    %v600 = vadd.f32 0.0, %v599
    %601 = vmatmul.bf16.gmra.mxu0 %v586
    %v602 = vpop.f32.mrf.mxu0
    %v603 = vadd.f32 0.0, %v602
    %v604 = vpop.f32.mrf.mxu0
    %v605 = vadd.f32 0.0, %v604
    %606 = vdwg.mxu0
    %v607 = vpack.c.bf16 %v600, %v598
    %v608 = vpack.c.bf16 %v605, %v603
    %v609 = vld [vmem:[#allocation2 + $0x100] sm:$0xf]
    %v610 = vld [vmem:[#allocation2 + $0x104] sm:$0xf]
    %v611 = vld [vmem:[#allocation2 + $0x108] sm:$0xf]
    %v612 = vld [vmem:[#allocation2 + $0x10c] sm:$0xf]
    %v613 = vld [vmem:[#allocation2 + $0x110] sm:$0xf]
    %v614 = vld [vmem:[#allocation2 + $0x114] sm:$0xf]
    %v615 = vld [vmem:[#allocation2 + $0x118] sm:$0xf]
    %v616 = vld [vmem:[#allocation2 + $0x11c] sm:$0xf]
    %v621 = vunpack.c.l.b16 %v613
    %v622 = vunpack.c.l.b16 %v614
    %v623 = vunpack.c.l.b16 %v615
    %v624 = vunpack.c.l.b16 %v616
    %v625 = vpack.c.b16 %v622, %v621
    %v626 = vpack.c.b16 %v624, %v623
    %v628 = vsel %vm58, %v625, 0
    %v631 = vsel %vm58, %v626, 0
    %633 = vmatpush.bf16.msra.mxu0 0
    %634 = vmatpush.bf16.msra.mxu0 0
    %635 = vmatpush.bf16.msra.mxu0 0
    %636 = vmatpush.bf16.msra.mxu0 0
    %637 = vmatpush.bf16.msra.mxu0 0
    %638 = vmatpush.bf16.msra.mxu0 0
    %639 = vmatpush.bf16.msra.mxu0 %v608
    %640 = vmatpush.bf16.msra.mxu0 %v607
    %641 = vmatmul.bf16.gmra.mxu0 %v628
    %v642 = vpop.f32.mrf.mxu0
    %v643 = vadd.f32 0.0, %v642
    %v644 = vpop.f32.mrf.mxu0
    %v645 = vadd.f32 0.0, %v644
    %646 = vmatmul.bf16.gmra.mxu0 %v631
    %v647 = vpop.f32.mrf.mxu0
    %v648 = vadd.f32 0.0, %v647
    %v649 = vpop.f32.mrf.mxu0
    %v650 = vadd.f32 0.0, %v649
    %651 = vdwg.mxu0
    %v656 = vunpack.c.l.b16 %v609
    %v657 = vunpack.c.l.b16 %v610
    %v658 = vunpack.c.l.b16 %v611
    %v659 = vunpack.c.l.b16 %v612
    %v660 = vpack.c.b16 %v657, %v656
    %v661 = vpack.c.b16 %v659, %v658
    %v663 = vsel %vm58, %v660, 0
    %v666 = vsel %vm58, %v661, 0
    %668 = vmatpush.bf16.msra.mxu0 0
    %669 = vmatpush.bf16.msra.mxu0 0
    %670 = vmatpush.bf16.msra.mxu0 0
    %671 = vmatpush.bf16.msra.mxu0 0
    %672 = vmatpush.bf16.msra.mxu0 0
    %673 = vmatpush.bf16.msra.mxu0 0
    %674 = vmatpush.bf16.msra.mxu0 %v581
    %675 = vmatpush.bf16.msra.mxu0 %v580
    %676 = vmatmul.bf16.gmra.mxu0 %v663
    %v677 = vpop.f32.mrf.mxu0
    %v678 = vadd.f32 %v643, %v677
    %v679 = vpop.f32.mrf.mxu0
    %v680 = vadd.f32 %v645, %v679
    %681 = vmatmul.bf16.gmra.mxu0 %v666
    %v682 = vpop.f32.mrf.mxu0
    %v683 = vadd.f32 %v648, %v682
    %v684 = vpop.f32.mrf.mxu0
    %v685 = vadd.f32 %v650, %v684
    %686 = vdwg.mxu0
    %v687 = vld [vmem:[#allocation2 + $0x120] sm:$0xf]
    %v688 = vld [vmem:[#allocation2 + $0x124] sm:$0xf]
    %v689 = vld [vmem:[#allocation2 + $0x128] sm:$0xf]
    %v690 = vld [vmem:[#allocation2 + $0x12c] sm:$0xf]
    %v691 = vunpack.c.l.bf16 %v687
    %v692 = vunpack.c.l.bf16 %v688
    %v693 = vunpack.c.l.bf16 %v689
    %v694 = vunpack.c.l.bf16 %v690
    %696 = vset.pattern.permute.xlu0 0
    %697 = vperm.xlu0 %696, %v691
    %v698 = vpop.permute.xlu0 %697
    %701 = vset.pattern.permute.xlu0 0
    %702 = vperm.xlu0 %701, %v692
    %v703 = vpop.permute.xlu0 %702
    %706 = vset.pattern.permute.xlu0 0
    %707 = vperm.xlu0 %706, %v693
    %v708 = vpop.permute.xlu0 %707
    %711 = vset.pattern.permute.xlu0 0
    %712 = vperm.xlu0 %711, %v694
    %v713 = vpop.permute.xlu0 %712
    %v715 = vadd.f32 %v678, %v698
    %v716 = vadd.f32 %v680, %v703
    %v717 = vadd.f32 %v683, %v708
    %v718 = vadd.f32 %v685, %v713
    %v719 = vmax.f32 %v715, 0.0
    %v720 = vmax.f32 %v716, 0.0
    %v721 = vmax.f32 %v717, 0.0
    %v722 = vmax.f32 %v718, 0.0
    %v723 = vunpack.c.l.bf16 %v411
    %v724 = vunpack.c.l.bf16 %v412
    %v725 = vunpack.c.l.bf16 %v413
    %v726 = vunpack.c.l.bf16 %v414
    %v727 = vadd.f32 %v719, %v723
    %v728 = vadd.f32 %v720, %v724
    %v729 = vadd.f32 %v721, %v725
    %v730 = vadd.f32 %v722, %v726
    %v731 = vmax.f32 %v727, 0.0
    %v732 = vmax.f32 %v728, 0.0
    %v733 = vmax.f32 %v729, 0.0
    %v734 = vmax.f32 %v730, 0.0
    %v735 = vpack.c.bf16 %v732, %v731
    %v736 = vpack.c.bf16 %v734, %v733
    %v737 = vld [vmem:[%s1] sm:$0xf]
    %v738 = vld [vmem:[%s1 + $0x4] sm:$0xf]
    %v741 = vunpack.c.l.b16 %v737
    %v742 = vunpack.c.l.b16 %v738
    %v743 = vpack.c.b16 %v742, %v741
    %v745 = vsel %vm58, %v743, 0
    %747 = vmatpush.bf16.msra.mxu0 0
    %748 = vmatpush.bf16.msra.mxu0 0
    %749 = vmatpush.bf16.msra.mxu0 0
    %750 = vmatpush.bf16.msra.mxu0 0
    %751 = vmatpush.bf16.msra.mxu0 0
    %752 = vmatpush.bf16.msra.mxu0 0
    %753 = vmatpush.bf16.msra.mxu0 %v55
    %754 = vmatpush.bf16.msra.mxu0 %v54
    %755 = vmatmul.bf16.gmra.mxu0 %v745
    %v756 = vpop.f32.mrf.mxu0
    %v757 = vadd.f32 0.0, %v756
    %v758 = vpop.f32.mrf.mxu0
    %v759 = vadd.f32 0.0, %v758
    %760 = vdwg.mxu0
    %v761 = vpack.c.bf16 %v759, %v757
    %v762 = vld [vmem:[#allocation2 + $0x130] sm:$0xf]
    %v763 = vld [vmem:[#allocation2 + $0x134] sm:$0xf]
    %v764 = vld [vmem:[#allocation2 + $0x138] sm:$0xf]
    %v765 = vld [vmem:[#allocation2 + $0x13c] sm:$0xf]
    %v766 = vld [vmem:[#allocation2 + $0x140] sm:$0xf]
    %v767 = vld [vmem:[#allocation2 + $0x144] sm:$0xf]
    %v768 = vld [vmem:[#allocation2 + $0x148] sm:$0xf]
    %v769 = vld [vmem:[#allocation2 + $0x14c] sm:$0xf]
    %v774 = vunpack.c.l.b16 %v766
    %v775 = vunpack.c.l.b16 %v767
    %v776 = vunpack.c.l.b16 %v768
    %v777 = vunpack.c.l.b16 %v769
    %v778 = vpack.c.b16 %v775, %v774
    %v779 = vpack.c.b16 %v777, %v776
    %v781 = vsel %vm95, %v778, 0
    %v784 = vsel %vm95, %v779, 0
    %786 = vmatpush.bf16.msra.mxu0 0
    %787 = vmatpush.bf16.msra.mxu0 0
    %788 = vmatpush.bf16.msra.mxu0 0
    %789 = vmatpush.bf16.msra.mxu0 0
    %790 = vmatpush.bf16.msra.mxu0 0
    %791 = vmatpush.bf16.msra.mxu0 0
    %792 = vmatpush.bf16.msra.mxu0 0
    %793 = vmatpush.bf16.msra.mxu0 %v761
    %794 = vmatmul.bf16.gmra.mxu0 %v781
    %v795 = vpop.f32.mrf.mxu0
    %v796 = vadd.f32 0.0, %v795
    %v797 = vpop.f32.mrf.mxu0
    %v798 = vadd.f32 0.0, %v797
    %799 = vmatmul.bf16.gmra.mxu0 %v784
    %v800 = vpop.f32.mrf.mxu0
    %v801 = vadd.f32 0.0, %v800
    %v802 = vpop.f32.mrf.mxu0
    %v803 = vadd.f32 0.0, %v802
    %804 = vdwg.mxu0
    %v809 = vunpack.c.l.b16 %v762
    %v810 = vunpack.c.l.b16 %v763
    %v811 = vunpack.c.l.b16 %v764
    %v812 = vunpack.c.l.b16 %v765
    %v813 = vpack.c.b16 %v810, %v809
    %v814 = vpack.c.b16 %v812, %v811
    %v817 = vsel %vm95, %v813, 0
    %v820 = vsel %vm95, %v814, 0
    %822 = vmatpush.bf16.msra.mxu0 0
    %823 = vmatpush.bf16.msra.mxu0 0
    %824 = vmatpush.bf16.msra.mxu0 0
    %825 = vmatpush.bf16.msra.mxu0 0
    %826 = vmatpush.bf16.msra.mxu0 0
    %827 = vmatpush.bf16.msra.mxu0 0
    %828 = vmatpush.bf16.msra.mxu0 0
    %829 = vmatpush.bf16.msra.mxu0 %v743
    %830 = vmatmul.bf16.gmra.mxu0 %v817
    %v831 = vpop.f32.mrf.mxu0
    %v832 = vadd.f32 %v796, %v831
    %v833 = vpop.f32.mrf.mxu0
    %v834 = vadd.f32 %v798, %v833
    %835 = vmatmul.bf16.gmra.mxu0 %v820
    %v836 = vpop.f32.mrf.mxu0
    %v837 = vadd.f32 %v801, %v836
    %v838 = vpop.f32.mrf.mxu0
    %v839 = vadd.f32 %v803, %v838
    %840 = vdwg.mxu0
    %v841 = vld [vmem:[#allocation2 + $0x150] sm:$0xf]
    %v842 = vld [vmem:[#allocation2 + $0x154] sm:$0xf]
    %v843 = vld [vmem:[#allocation2 + $0x158] sm:$0xf]
    %v844 = vld [vmem:[#allocation2 + $0x15c] sm:$0xf]
    %v845 = vunpack.c.l.bf16 %v841
    %v846 = vunpack.c.l.bf16 %v842
    %v847 = vunpack.c.l.bf16 %v843
    %v848 = vunpack.c.l.bf16 %v844
    %850 = vset.pattern.permute.xlu0 0
    %851 = vperm.xlu0 %850, %v845
    %v852 = vpop.permute.xlu0 %851
    %855 = vset.pattern.permute.xlu0 0
    %856 = vperm.xlu0 %855, %v846
    %v857 = vpop.permute.xlu0 %856
    %860 = vset.pattern.permute.xlu0 0
    %861 = vperm.xlu0 %860, %v847
    %v862 = vpop.permute.xlu0 %861
    %865 = vset.pattern.permute.xlu0 0
    %866 = vperm.xlu0 %865, %v848
    %v867 = vpop.permute.xlu0 %866
    %v869 = vadd.f32 %v832, %v852
    %v870 = vadd.f32 %v834, %v857
    %v871 = vadd.f32 %v837, %v862
    %v872 = vadd.f32 %v839, %v867
    %v873 = vmax.f32 %v869, 0.0
    %v874 = vmax.f32 %v870, 0.0
    %v875 = vmax.f32 %v871, 0.0
    %v876 = vmax.f32 %v872, 0.0
    %v877 = vpack.c.bf16 %v874, %v873
    %v878 = vpack.c.bf16 %v876, %v875
    %v880 = vsel %vm58, %v877, 0
    %v883 = vsel %vm58, %v878, 0
    %885 = vmatpush.bf16.msra.mxu0 0
    %886 = vmatpush.bf16.msra.mxu0 0
    %887 = vmatpush.bf16.msra.mxu0 0
    %888 = vmatpush.bf16.msra.mxu0 0
    %889 = vmatpush.bf16.msra.mxu0 0
    %890 = vmatpush.bf16.msra.mxu0 0
    %891 = vmatpush.bf16.msra.mxu0 %v55
    %892 = vmatpush.bf16.msra.mxu0 %v54
    %893 = vmatmul.bf16.gmra.mxu0 %v880
    %v894 = vpop.f32.mrf.mxu0
    %v895 = vadd.f32 0.0, %v894
    %v896 = vpop.f32.mrf.mxu0
    %v897 = vadd.f32 0.0, %v896
    %898 = vmatmul.bf16.gmra.mxu0 %v883
    %v899 = vpop.f32.mrf.mxu0
    %v900 = vadd.f32 0.0, %v899
    %v901 = vpop.f32.mrf.mxu0
    %v902 = vadd.f32 0.0, %v901
    %903 = vdwg.mxu0
    %v904 = vpack.c.bf16 %v897, %v895
    %v905 = vpack.c.bf16 %v902, %v900
    %v906 = vld [vmem:[#allocation2 + $0x160] sm:$0xf]
    %v907 = vld [vmem:[#allocation2 + $0x164] sm:$0xf]
    %v908 = vld [vmem:[#allocation2 + $0x168] sm:$0xf]
    %v909 = vld [vmem:[#allocation2 + $0x16c] sm:$0xf]
    %v910 = vld [vmem:[#allocation2 + $0x170] sm:$0xf]
    %v911 = vld [vmem:[#allocation2 + $0x174] sm:$0xf]
    %v912 = vld [vmem:[#allocation2 + $0x178] sm:$0xf]
    %v913 = vld [vmem:[#allocation2 + $0x17c] sm:$0xf]
    %v918 = vunpack.c.l.b16 %v910
    %v919 = vunpack.c.l.b16 %v911
    %v920 = vunpack.c.l.b16 %v912
    %v921 = vunpack.c.l.b16 %v913
    %v922 = vpack.c.b16 %v919, %v918
    %v923 = vpack.c.b16 %v921, %v920
    %v925 = vsel %vm58, %v922, 0
    %v928 = vsel %vm58, %v923, 0
    %930 = vmatpush.bf16.msra.mxu0 0
    %931 = vmatpush.bf16.msra.mxu0 0
    %932 = vmatpush.bf16.msra.mxu0 0
    %933 = vmatpush.bf16.msra.mxu0 0
    %934 = vmatpush.bf16.msra.mxu0 0
    %935 = vmatpush.bf16.msra.mxu0 0
    %936 = vmatpush.bf16.msra.mxu0 %v905
    %937 = vmatpush.bf16.msra.mxu0 %v904
    %938 = vmatmul.bf16.gmra.mxu0 %v925
    %v939 = vpop.f32.mrf.mxu0
    %v940 = vadd.f32 0.0, %v939
    %v941 = vpop.f32.mrf.mxu0
    %v942 = vadd.f32 0.0, %v941
    %943 = vmatmul.bf16.gmra.mxu0 %v928
    %v944 = vpop.f32.mrf.mxu0
    %v945 = vadd.f32 0.0, %v944
    %v946 = vpop.f32.mrf.mxu0
    %v947 = vadd.f32 0.0, %v946
    %948 = vdwg.mxu0
    %v953 = vunpack.c.l.b16 %v906
    %v954 = vunpack.c.l.b16 %v907
    %v955 = vunpack.c.l.b16 %v908
    %v956 = vunpack.c.l.b16 %v909
    %v957 = vpack.c.b16 %v954, %v953
    %v958 = vpack.c.b16 %v956, %v955
    %v960 = vsel %vm58, %v957, 0
    %v963 = vsel %vm58, %v958, 0
    %965 = vmatpush.bf16.msra.mxu0 0
    %966 = vmatpush.bf16.msra.mxu0 0
    %967 = vmatpush.bf16.msra.mxu0 0
    %968 = vmatpush.bf16.msra.mxu0 0
    %969 = vmatpush.bf16.msra.mxu0 0
    %970 = vmatpush.bf16.msra.mxu0 0
    %971 = vmatpush.bf16.msra.mxu0 %v878
    %972 = vmatpush.bf16.msra.mxu0 %v877
    %973 = vmatmul.bf16.gmra.mxu0 %v960
    %v974 = vpop.f32.mrf.mxu0
    %v975 = vadd.f32 %v940, %v974
    %v976 = vpop.f32.mrf.mxu0
    %v977 = vadd.f32 %v942, %v976
    %978 = vmatmul.bf16.gmra.mxu0 %v963
    %v979 = vpop.f32.mrf.mxu0
    %v980 = vadd.f32 %v945, %v979
    %v981 = vpop.f32.mrf.mxu0
    %v982 = vadd.f32 %v947, %v981
    %983 = vdwg.mxu0
    %v984 = vld [vmem:[#allocation2 + $0x180] sm:$0xf]
    %v985 = vld [vmem:[#allocation2 + $0x184] sm:$0xf]
    %v986 = vld [vmem:[#allocation2 + $0x188] sm:$0xf]
    %v987 = vld [vmem:[#allocation2 + $0x18c] sm:$0xf]
    %v988 = vunpack.c.l.bf16 %v984
    %v989 = vunpack.c.l.bf16 %v985
    %v990 = vunpack.c.l.bf16 %v986
    %v991 = vunpack.c.l.bf16 %v987
    %993 = vset.pattern.permute.xlu0 0
    %994 = vperm.xlu0 %993, %v988
    %v995 = vpop.permute.xlu0 %994
    %998 = vset.pattern.permute.xlu0 0
    %999 = vperm.xlu0 %998, %v989
    %v1000 = vpop.permute.xlu0 %999
    %1003 = vset.pattern.permute.xlu0 0
    %1004 = vperm.xlu0 %1003, %v990
    %v1005 = vpop.permute.xlu0 %1004
    %1008 = vset.pattern.permute.xlu0 0
    %1009 = vperm.xlu0 %1008, %v991
    %v1010 = vpop.permute.xlu0 %1009
    %v1012 = vadd.f32 %v975, %v995
    %v1013 = vadd.f32 %v977, %v1000
    %v1014 = vadd.f32 %v980, %v1005
    %v1015 = vadd.f32 %v982, %v1010
    %v1016 = vmax.f32 %v1012, 0.0
    %v1017 = vmax.f32 %v1013, 0.0
    %v1018 = vmax.f32 %v1014, 0.0
    %v1019 = vmax.f32 %v1015, 0.0
    %v1020 = vld [vmem:[#allocation2 + $0x190] sm:$0xf]
    %v1021 = vld [vmem:[#allocation2 + $0x194] sm:$0xf]
    %v1022 = vld [vmem:[#allocation2 + $0x198] sm:$0xf]
    %v1023 = vld [vmem:[#allocation2 + $0x19c] sm:$0xf]
    %v1024 = vld [vmem:[#allocation2 + $0x1a0] sm:$0xf]
    %v1025 = vld [vmem:[#allocation2 + $0x1a4] sm:$0xf]
    %v1026 = vld [vmem:[#allocation2 + $0x1a8] sm:$0xf]
    %v1027 = vld [vmem:[#allocation2 + $0x1ac] sm:$0xf]
    %v1028 = vunpack.c.l.bf16 %v1024
    %v1029 = vunpack.c.l.bf16 %v1025
    %v1030 = vunpack.c.l.bf16 %v1026
    %v1031 = vunpack.c.l.bf16 %v1027
    %1033 = vset.pattern.permute.xlu0 0
    %1034 = vperm.xlu0 %1033, %v1028
    %v1035 = vpop.permute.xlu0 %1034
    %1038 = vset.pattern.permute.xlu0 0
    %1039 = vperm.xlu0 %1038, %v1029
    %v1040 = vpop.permute.xlu0 %1039
    %1043 = vset.pattern.permute.xlu0 0
    %1044 = vperm.xlu0 %1043, %v1030
    %v1045 = vpop.permute.xlu0 %1044
    %1048 = vset.pattern.permute.xlu0 0
    %1049 = vperm.xlu0 %1048, %v1031
    %v1050 = vpop.permute.xlu0 %1049
    %v1056 = vunpack.c.l.b16 %v1020
    %v1057 = vunpack.c.l.b16 %v1021
    %v1058 = vunpack.c.l.b16 %v1022
    %v1059 = vunpack.c.l.b16 %v1023
    %v1060 = vpack.c.b16 %v1057, %v1056
    %v1061 = vpack.c.b16 %v1059, %v1058
    %v1063 = vsel %vm95, %v1060, 0
    %v1066 = vsel %vm95, %v1061, 0
    %1068 = vmatpush.bf16.msra.mxu0 0
    %1069 = vmatpush.bf16.msra.mxu0 0
    %1070 = vmatpush.bf16.msra.mxu0 0
    %1071 = vmatpush.bf16.msra.mxu0 0
    %1072 = vmatpush.bf16.msra.mxu0 0
    %1073 = vmatpush.bf16.msra.mxu0 0
    %1074 = vmatpush.bf16.msra.mxu0 0
    %1075 = vmatpush.bf16.msra.mxu0 %v743
    %1076 = vmatmul.bf16.gmra.mxu0 %v1063
    %v1077 = vpop.f32.mrf.mxu0
    %v1078 = vadd.f32 %v1035, %v1077
    %v1079 = vpop.f32.mrf.mxu0
    %v1080 = vadd.f32 %v1040, %v1079
    %1081 = vmatmul.bf16.gmra.mxu0 %v1066
    %v1082 = vpop.f32.mrf.mxu0
    %v1083 = vadd.f32 %v1045, %v1082
    %v1084 = vpop.f32.mrf.mxu0
    %v1085 = vadd.f32 %v1050, %v1084
    %1086 = vdwg.mxu0
    %v1087 = vadd.f32 %v1016, %v1078
    %v1088 = vadd.f32 %v1017, %v1080
    %v1089 = vadd.f32 %v1018, %v1083
    %v1090 = vadd.f32 %v1019, %v1085
    %v1091 = vmax.f32 %v1087, 0.0
    %v1092 = vmax.f32 %v1088, 0.0
    %v1093 = vmax.f32 %v1089, 0.0
    %v1094 = vmax.f32 %v1090, 0.0
    %v1095 = vpack.c.bf16 %v1091, %v1091
    %v1096 = vpack.c.bf16 %v1092, %v1092
    %v1097 = vpack.c.bf16 %v1093, %v1093
    %v1098 = vpack.c.bf16 %v1094, %v1094
    %v1103 = vunpack.c.l.b16 %v1095
    %v1104 = vunpack.c.l.b16 %v1096
    %v1105 = vunpack.c.l.b16 %v1097
    %v1106 = vunpack.c.l.b16 %v1098
    %v1107 = vpack.c.b16 %v1104, %v1103
    %v1108 = vpack.c.b16 %v1106, %v1105
    %v1110 = vsel %vm58, %v1107, 0
    %v1113 = vsel %vm58, %v1108, 0
    %1115 = vmatpush.bf16.msra.mxu0 0
    %1116 = vmatpush.bf16.msra.mxu0 0
    %1117 = vmatpush.bf16.msra.mxu0 0
    %1118 = vmatpush.bf16.msra.mxu0 0
    %1119 = vmatpush.bf16.msra.mxu0 0
    %1120 = vmatpush.bf16.msra.mxu0 0
    %1121 = vmatpush.bf16.msra.mxu0 %v434
    %1122 = vmatpush.bf16.msra.mxu0 %v433
    %1123 = vmatmul.bf16.gmra.mxu0 %v1110
    %v1124 = vpop.f32.mrf.mxu0
    %v1125 = vadd.f32 0.0, %v1124
    %v1126 = vpop.f32.mrf.mxu0
    %v1127 = vadd.f32 0.0, %v1126
    %1128 = vmatmul.bf16.gmra.mxu0 %v1113
    %v1129 = vpop.f32.mrf.mxu0
    %v1130 = vadd.f32 0.0, %v1129
    %v1131 = vpop.f32.mrf.mxu0
    %v1132 = vadd.f32 0.0, %v1131
    %1133 = vdwg.mxu0
    %v1134 = vpack.c.bf16 %v1127, %v1125
    %v1135 = vpack.c.bf16 %v1132, %v1130
    %v1136 = vld [vmem:[#allocation2 + $0x1b0] sm:$0xf]
    %v1137 = vld [vmem:[#allocation2 + $0x1b4] sm:$0xf]
    %v1138 = vld [vmem:[#allocation2 + $0x1b8] sm:$0xf]
    %v1139 = vld [vmem:[#allocation2 + $0x1bc] sm:$0xf]
    %v1140 = vld [vmem:[#allocation2 + $0x1c0] sm:$0xf]
    %v1141 = vld [vmem:[#allocation2 + $0x1c4] sm:$0xf]
    %v1142 = vld [vmem:[#allocation2 + $0x1c8] sm:$0xf]
    %v1143 = vld [vmem:[#allocation2 + $0x1cc] sm:$0xf]
    %v1148 = vunpack.c.l.b16 %v1140
    %v1149 = vunpack.c.l.b16 %v1141
    %v1150 = vunpack.c.l.b16 %v1142
    %v1151 = vunpack.c.l.b16 %v1143
    %v1152 = vpack.c.b16 %v1149, %v1148
    %v1153 = vpack.c.b16 %v1151, %v1150
    %v1155 = vsel %vm58, %v1152, 0
    %v1158 = vsel %vm58, %v1153, 0
    %1160 = vmatpush.bf16.msra.mxu0 0
    %1161 = vmatpush.bf16.msra.mxu0 0
    %1162 = vmatpush.bf16.msra.mxu0 0
    %1163 = vmatpush.bf16.msra.mxu0 0
    %1164 = vmatpush.bf16.msra.mxu0 0
    %1165 = vmatpush.bf16.msra.mxu0 0
    %1166 = vmatpush.bf16.msra.mxu0 %v1135
    %1167 = vmatpush.bf16.msra.mxu0 %v1134
    %1168 = vmatmul.bf16.gmra.mxu0 %v1155
    %v1169 = vpop.f32.mrf.mxu0
    %v1170 = vadd.f32 0.0, %v1169
    %v1171 = vpop.f32.mrf.mxu0
    %v1172 = vadd.f32 0.0, %v1171
    %1173 = vmatmul.bf16.gmra.mxu0 %v1158
    %v1174 = vpop.f32.mrf.mxu0
    %v1175 = vadd.f32 0.0, %v1174
    %v1176 = vpop.f32.mrf.mxu0
    %v1177 = vadd.f32 0.0, %v1176
    %1178 = vdwg.mxu0
    %v1183 = vunpack.c.l.b16 %v1136
    %v1184 = vunpack.c.l.b16 %v1137
    %v1185 = vunpack.c.l.b16 %v1138
    %v1186 = vunpack.c.l.b16 %v1139
    %v1187 = vpack.c.b16 %v1184, %v1183
    %v1188 = vpack.c.b16 %v1186, %v1185
    %v1192 = vsel %vm58, %v1187, 0
    %v1195 = vsel %vm58, %v1188, 0
    %1197 = vmatpush.bf16.msra.mxu0 0
    %1198 = vmatpush.bf16.msra.mxu0 0
    %1199 = vmatpush.bf16.msra.mxu0 0
    %1200 = vmatpush.bf16.msra.mxu0 0
    %1201 = vmatpush.bf16.msra.mxu0 0
    %1202 = vmatpush.bf16.msra.mxu0 0
    %1203 = vmatpush.bf16.msra.mxu0 %v1108
    %1204 = vmatpush.bf16.msra.mxu0 %v1107
    %1205 = vmatmul.bf16.gmra.mxu0 %v1192
    %v1206 = vpop.f32.mrf.mxu0
    %v1207 = vadd.f32 %v1170, %v1206
    %v1208 = vpop.f32.mrf.mxu0
    %v1209 = vadd.f32 %v1172, %v1208
    %1210 = vmatmul.bf16.gmra.mxu0 %v1195
    %v1211 = vpop.f32.mrf.mxu0
    %v1212 = vadd.f32 %v1175, %v1211
    %v1213 = vpop.f32.mrf.mxu0
    %v1214 = vadd.f32 %v1177, %v1213
    %1215 = vdwg.mxu0
    %v1216 = vld [vmem:[#allocation2 + $0x1d0] sm:$0xf]
    %v1217 = vld [vmem:[#allocation2 + $0x1d4] sm:$0xf]
    %v1218 = vld [vmem:[#allocation2 + $0x1d8] sm:$0xf]
    %v1219 = vld [vmem:[#allocation2 + $0x1dc] sm:$0xf]
    %v1220 = vunpack.c.l.bf16 %v1216
    %v1221 = vunpack.c.l.bf16 %v1217
    %v1222 = vunpack.c.l.bf16 %v1218
    %v1223 = vunpack.c.l.bf16 %v1219
    %1225 = vset.pattern.permute.xlu0 0
    %1226 = vperm.xlu0 %1225, %v1220
    %v1227 = vpop.permute.xlu0 %1226
    %1230 = vset.pattern.permute.xlu0 0
    %1231 = vperm.xlu0 %1230, %v1221
    %v1232 = vpop.permute.xlu0 %1231
    %1235 = vset.pattern.permute.xlu0 0
    %1236 = vperm.xlu0 %1235, %v1222
    %v1237 = vpop.permute.xlu0 %1236
    %1240 = vset.pattern.permute.xlu0 0
    %1241 = vperm.xlu0 %1240, %v1223
    %v1242 = vpop.permute.xlu0 %1241
    %v1244 = vadd.f32 %v1207, %v1227
    %v1245 = vadd.f32 %v1209, %v1232
    %v1246 = vadd.f32 %v1212, %v1237
    %v1247 = vadd.f32 %v1214, %v1242
    %v1248 = vmax.f32 %v1244, 0.0
    %v1249 = vmax.f32 %v1245, 0.0
    %v1250 = vmax.f32 %v1246, 0.0
    %v1251 = vmax.f32 %v1247, 0.0
    %v1252 = vpack.c.bf16 %v1249, %v1248
    %v1253 = vpack.c.bf16 %v1251, %v1250
    %v1255 = vsel %vm58, %v1252, 0
    %v1258 = vsel %vm58, %v1253, 0
    %1260 = vmatpush.bf16.msra.mxu0 0
    %1261 = vmatpush.bf16.msra.mxu0 0
    %1262 = vmatpush.bf16.msra.mxu0 0
    %1263 = vmatpush.bf16.msra.mxu0 0
    %1264 = vmatpush.bf16.msra.mxu0 0
    %1265 = vmatpush.bf16.msra.mxu0 0
    %1266 = vmatpush.bf16.msra.mxu0 %v434
    %1267 = vmatpush.bf16.msra.mxu0 %v433
    %1268 = vmatmul.bf16.gmra.mxu0 %v1255
    %v1269 = vpop.f32.mrf.mxu0
    %v1270 = vadd.f32 0.0, %v1269
    %v1271 = vpop.f32.mrf.mxu0
    %v1272 = vadd.f32 0.0, %v1271
    %1273 = vmatmul.bf16.gmra.mxu0 %v1258
    %v1274 = vpop.f32.mrf.mxu0
    %v1275 = vadd.f32 0.0, %v1274
    %v1276 = vpop.f32.mrf.mxu0
    %v1277 = vadd.f32 0.0, %v1276
    %1278 = vdwg.mxu0
    %v1279 = vpack.c.bf16 %v1272, %v1270
    %v1280 = vpack.c.bf16 %v1277, %v1275
    %v1281 = vld [vmem:[#allocation2 + $0x1e0] sm:$0xf]
    %v1282 = vld [vmem:[#allocation2 + $0x1e4] sm:$0xf]
    %v1283 = vld [vmem:[#allocation2 + $0x1e8] sm:$0xf]
    %v1284 = vld [vmem:[#allocation2 + $0x1ec] sm:$0xf]
    %v1285 = vld [vmem:[#allocation2 + $0x1f0] sm:$0xf]
    %v1286 = vld [vmem:[#allocation2 + $0x1f4] sm:$0xf]
    %v1287 = vld [vmem:[#allocation2 + $0x1f8] sm:$0xf]
    %v1288 = vld [vmem:[#allocation2 + $0x1fc] sm:$0xf]
    %v1293 = vunpack.c.l.b16 %v1285
    %v1294 = vunpack.c.l.b16 %v1286
    %v1295 = vunpack.c.l.b16 %v1287
    %v1296 = vunpack.c.l.b16 %v1288
    %v1297 = vpack.c.b16 %v1294, %v1293
    %v1298 = vpack.c.b16 %v1296, %v1295
    %v1300 = vsel %vm58, %v1297, 0
    %v1303 = vsel %vm58, %v1298, 0
    %1305 = vmatpush.bf16.msra.mxu0 0
    %1306 = vmatpush.bf16.msra.mxu0 0
    %1307 = vmatpush.bf16.msra.mxu0 0
    %1308 = vmatpush.bf16.msra.mxu0 0
    %1309 = vmatpush.bf16.msra.mxu0 0
    %1310 = vmatpush.bf16.msra.mxu0 0
    %1311 = vmatpush.bf16.msra.mxu0 %v1280
    %1312 = vmatpush.bf16.msra.mxu0 %v1279
    %1313 = vmatmul.bf16.gmra.mxu0 %v1300
    %v1314 = vpop.f32.mrf.mxu0
    %v1315 = vadd.f32 0.0, %v1314
    %v1316 = vpop.f32.mrf.mxu0
    %v1317 = vadd.f32 0.0, %v1316
    %1318 = vmatmul.bf16.gmra.mxu0 %v1303
    %v1319 = vpop.f32.mrf.mxu0
    %v1320 = vadd.f32 0.0, %v1319
    %v1321 = vpop.f32.mrf.mxu0
    %v1322 = vadd.f32 0.0, %v1321
    %1323 = vdwg.mxu0
    %v1328 = vunpack.c.l.b16 %v1281
    %v1329 = vunpack.c.l.b16 %v1282
    %v1330 = vunpack.c.l.b16 %v1283
    %v1331 = vunpack.c.l.b16 %v1284
    %v1332 = vpack.c.b16 %v1329, %v1328
    %v1333 = vpack.c.b16 %v1331, %v1330
    %v1335 = vsel %vm58, %v1332, 0
    %v1338 = vsel %vm58, %v1333, 0
    %1340 = vmatpush.bf16.msra.mxu0 0
    %1341 = vmatpush.bf16.msra.mxu0 0
    %1342 = vmatpush.bf16.msra.mxu0 0
    %1343 = vmatpush.bf16.msra.mxu0 0
    %1344 = vmatpush.bf16.msra.mxu0 0
    %1345 = vmatpush.bf16.msra.mxu0 0
    %1346 = vmatpush.bf16.msra.mxu0 %v1253
    %1347 = vmatpush.bf16.msra.mxu0 %v1252
    %1348 = vmatmul.bf16.gmra.mxu0 %v1335
    %v1349 = vpop.f32.mrf.mxu0
    %v1350 = vadd.f32 %v1315, %v1349
    %v1351 = vpop.f32.mrf.mxu0
    %v1352 = vadd.f32 %v1317, %v1351
    %1353 = vmatmul.bf16.gmra.mxu0 %v1338
    %v1354 = vpop.f32.mrf.mxu0
    %v1355 = vadd.f32 %v1320, %v1354
    %v1356 = vpop.f32.mrf.mxu0
    %v1357 = vadd.f32 %v1322, %v1356
    %1358 = vdwg.mxu0
    %v1359 = vld [vmem:[#allocation2 + $0x200] sm:$0xf]
    %v1360 = vld [vmem:[#allocation2 + $0x204] sm:$0xf]
    %v1361 = vld [vmem:[#allocation2 + $0x208] sm:$0xf]
    %v1362 = vld [vmem:[#allocation2 + $0x20c] sm:$0xf]
    %v1363 = vunpack.c.l.bf16 %v1359
    %v1364 = vunpack.c.l.bf16 %v1360
    %v1365 = vunpack.c.l.bf16 %v1361
    %v1366 = vunpack.c.l.bf16 %v1362
    %1368 = vset.pattern.permute.xlu0 0
    %1369 = vperm.xlu0 %1368, %v1363
    %v1370 = vpop.permute.xlu0 %1369
    %1373 = vset.pattern.permute.xlu0 0
    %1374 = vperm.xlu0 %1373, %v1364
    %v1375 = vpop.permute.xlu0 %1374
    %1378 = vset.pattern.permute.xlu0 0
    %1379 = vperm.xlu0 %1378, %v1365
    %v1380 = vpop.permute.xlu0 %1379
    %1383 = vset.pattern.permute.xlu0 0
    %1384 = vperm.xlu0 %1383, %v1366
    %v1385 = vpop.permute.xlu0 %1384
    %v1387 = vadd.f32 %v1350, %v1370
    %v1388 = vadd.f32 %v1352, %v1375
    %v1389 = vadd.f32 %v1355, %v1380
    %v1390 = vadd.f32 %v1357, %v1385
    %v1391 = vmax.f32 %v1387, 0.0
    %v1392 = vmax.f32 %v1388, 0.0
    %v1393 = vmax.f32 %v1389, 0.0
    %v1394 = vmax.f32 %v1390, 0.0
    %v1395 = vunpack.c.l.bf16 %v1095
    %v1396 = vunpack.c.l.bf16 %v1096
    %v1397 = vunpack.c.l.bf16 %v1097
    %v1398 = vunpack.c.l.bf16 %v1098
    %v1399 = vadd.f32 %v1391, %v1395
    %v1400 = vadd.f32 %v1392, %v1396
    %v1401 = vadd.f32 %v1393, %v1397
    %v1402 = vadd.f32 %v1394, %v1398
    %v1403 = vmax.f32 %v1399, 0.0
    %v1404 = vmax.f32 %v1400, 0.0
    %v1405 = vmax.f32 %v1401, 0.0
    %v1406 = vmax.f32 %v1402, 0.0
    %v1407 = vpack.c.bf16 %v1404, %v1403
    %v1408 = vpack.c.bf16 %v1406, %v1405
    %v1409 = vld [vmem:[#allocation2 + $0x210] sm:$0xf]
    %v1410 = vld [vmem:[#allocation2 + $0x214] sm:$0xf]
    %v1411 = vld [vmem:[#allocation2 + $0x218] sm:$0xf]
    %v1412 = vld [vmem:[#allocation2 + $0x21c] sm:$0xf]
    %v1413 = vld [vmem:[#allocation2 + $0x240] sm:$0x1]
    %v1414 = vunpack.c.l.bf16 %v1413
    %v1415 = vperm.slane %v1414, 0
    %v1420 = vunpack.c.l.b16 %v1409
    %v1421 = vunpack.c.l.b16 %v1410
    %v1422 = vunpack.c.l.b16 %v1411
    %v1423 = vunpack.c.l.b16 %v1412
    %v1424 = vpack.c.b16 %v1421, %v1420
    %v1425 = vpack.c.b16 %v1423, %v1422
    %v1429 = vsel %vm58, %v735, 0
    %v1432 = vsel %vm58, %v736, 0
    %1434 = vmatpush.bf16.msra.mxu0 0
    %1435 = vmatpush.bf16.msra.mxu0 0
    %1436 = vmatpush.bf16.msra.mxu0 0
    %1437 = vmatpush.bf16.msra.mxu0 0
    %1438 = vmatpush.bf16.msra.mxu0 0
    %1439 = vmatpush.bf16.msra.mxu0 0
    %1440 = vmatpush.bf16.msra.mxu0 %v1425
    %1441 = vmatpush.bf16.msra.mxu0 %v1424
    %1442 = vmatmul.bf16.gmra.mxu0 %v1429
    %v1443 = vpop.f32.mrf.mxu0
    %v1444 = vadd.f32 %v1415, %v1443
    %v1445 = vpop.f32.mrf.mxu0
    %v1446 = vadd.f32 %v1415, %v1445
    %1447 = vmatmul.bf16.gmra.mxu0 %v1432
    %v1448 = vpop.f32.mrf.mxu0
    %v1449 = vadd.f32 %v1415, %v1448
    %v1450 = vpop.f32.mrf.mxu0
    %v1451 = vadd.f32 %v1415, %v1450
    %1452 = vdwg.mxu0
    %v1453 = vpack.c.bf16 %v1446, %v1444
    %v1454 = vpack.c.bf16 %v1451, %v1449
    %v1455 = vld [vmem:[#allocation2 + $0x220] sm:$0xf]
    %v1456 = vld [vmem:[#allocation2 + $0x224] sm:$0xf]
    %v1457 = vld [vmem:[#allocation2 + $0x228] sm:$0xf]
    %v1458 = vld [vmem:[#allocation2 + $0x22c] sm:$0xf]
    %v1459 = vld [vmem:[#allocation2 + $0x248] sm:$0x1]
    %v1460 = vunpack.c.l.bf16 %v1459
    %v1461 = vperm.slane %v1460, 0
    %v1466 = vunpack.c.l.b16 %v1455
    %v1467 = vunpack.c.l.b16 %v1456
    %v1468 = vunpack.c.l.b16 %v1457
    %v1469 = vunpack.c.l.b16 %v1458
    %v1470 = vpack.c.b16 %v1467, %v1466
    %v1471 = vpack.c.b16 %v1469, %v1468
    %1474 = vmatpush.bf16.msra.mxu0 0
    %1475 = vmatpush.bf16.msra.mxu0 0
    %1476 = vmatpush.bf16.msra.mxu0 0
    %1477 = vmatpush.bf16.msra.mxu0 0
    %1478 = vmatpush.bf16.msra.mxu0 0
    %1479 = vmatpush.bf16.msra.mxu0 0
    %1480 = vmatpush.bf16.msra.mxu0 %v1471
    %1481 = vmatpush.bf16.msra.mxu0 %v1470
    %1482 = vmatmul.bf16.gmra.mxu0 %v1429
    %v1483 = vpop.f32.mrf.mxu0
    %v1484 = vadd.f32 %v1461, %v1483
    %v1485 = vpop.f32.mrf.mxu0
    %v1486 = vadd.f32 %v1461, %v1485
    %1487 = vmatmul.bf16.gmra.mxu0 %v1432
    %v1488 = vpop.f32.mrf.mxu0
    %v1489 = vadd.f32 %v1461, %v1488
    %v1490 = vpop.f32.mrf.mxu0
    %v1491 = vadd.f32 %v1461, %v1490
    %1492 = vdwg.mxu0
    %v1493 = vpack.c.bf16 %v1486, %v1484
    %v1494 = vpack.c.bf16 %v1491, %v1489
    %v1495 = vld [vmem:[#allocation2 + $0x230] sm:$0xf]
    %v1496 = vld [vmem:[#allocation2 + $0x234] sm:$0xf]
    %v1497 = vld [vmem:[#allocation2 + $0x238] sm:$0xf]
    %v1498 = vld [vmem:[#allocation2 + $0x23c] sm:$0xf]
    %v1499 = vld [vmem:[#allocation2 + $0x250] sm:$0x1]
    %v1500 = vunpack.c.l.bf16 %v1499
    %v1501 = vperm.slane %v1500, 0
    %v1506 = vunpack.c.l.b16 %v1495
    %v1507 = vunpack.c.l.b16 %v1496
    %v1508 = vunpack.c.l.b16 %v1497
    %v1509 = vunpack.c.l.b16 %v1498
    %v1510 = vpack.c.b16 %v1507, %v1506
    %v1511 = vpack.c.b16 %v1509, %v1508
    %1514 = vmatpush.bf16.msra.mxu0 0
    %1515 = vmatpush.bf16.msra.mxu0 0
    %1516 = vmatpush.bf16.msra.mxu0 0
    %1517 = vmatpush.bf16.msra.mxu0 0
    %1518 = vmatpush.bf16.msra.mxu0 0
    %1519 = vmatpush.bf16.msra.mxu0 0
    %1520 = vmatpush.bf16.msra.mxu0 %v1511
    %1521 = vmatpush.bf16.msra.mxu0 %v1510
    %1522 = vmatmul.bf16.gmra.mxu0 %v1429
    %v1523 = vpop.f32.mrf.mxu0
    %v1524 = vadd.f32 %v1501, %v1523
    %v1525 = vpop.f32.mrf.mxu0
    %v1526 = vadd.f32 %v1501, %v1525
    %1527 = vmatmul.bf16.gmra.mxu0 %v1432
    %v1528 = vpop.f32.mrf.mxu0
    %v1529 = vadd.f32 %v1501, %v1528
    %v1530 = vpop.f32.mrf.mxu0
    %v1531 = vadd.f32 %v1501, %v1530
    %1532 = vdwg.mxu0
    %v1533 = vpack.c.bf16 %v1526, %v1524
    %v1534 = vpack.c.bf16 %v1531, %v1529
    %v1536 = vsel %vm58, %v1453, 0
    %v1539 = vsel %vm58, %v1454, 0
    %v1542 = vsel %vm58, %v1493, 0
    %v1545 = vsel %vm58, %v1494, 0
    %1547 = vmatpush.bf16.xpose.msra.mxu0 0
    %1548 = vmatpush.bf16.xpose.msra.mxu0 0
    %1549 = vmatpush.bf16.xpose.msra.mxu0 0
    %1550 = vmatpush.bf16.xpose.msra.mxu0 0
    %1551 = vmatpush.bf16.xpose.msra.mxu0 0
    %1552 = vmatpush.bf16.xpose.msra.mxu0 0
    %1553 = vmatpush.bf16.xpose.msra.mxu0 %v1545
    %1554 = vmatpush.bf16.xpose.msra.mxu0 %v1542
    %1555 = vmatmul.bf16.gmra.mxu0 %v1536
    %v1556 = vpop.f32.mrf.mxu0
    %v1557 = vadd.f32 0.0, %v1556
    %v1558 = vpop.f32.mrf.mxu0
    %v1559 = vadd.f32 0.0, %v1558
    %1560 = vmatmul.bf16.gmra.mxu0 %v1539
    %v1561 = vpop.f32.mrf.mxu0
    %v1562 = vadd.f32 0.0, %v1561
    %v1563 = vpop.f32.mrf.mxu0
    %v1564 = vadd.f32 0.0, %v1563
    %1565 = vdwg.mxu0
    %v1566 = vmul.f32 %v1557, 0.17677669
    %v1567 = vmul.f32 %v1559, 0.17677669
    %v1568 = vmul.f32 %v1562, 0.17677669
    %v1569 = vmul.f32 %v1564, 0.17677669
    %v1570 = vld [vmem:[#allocation2 + $0x20] sm:$0xf]
    %v1571 = vld [vmem:[#allocation2 + $0x24] sm:$0xf]
    %v1572 = vld [vmem:[#allocation2 + $0x28] sm:$0xf]
    %v1573 = vld [vmem:[#allocation2 + $0x2c] sm:$0xf]
    %v1574 = vunpack.c.l.bf16 %v1570
    %v1575 = vunpack.c.l.bf16 %v1571
    %v1576 = vunpack.c.l.bf16 %v1572
    %v1577 = vunpack.c.l.bf16 %v1573
    %v1578 = vadd.f32 %v1566, %v1574
    %v1579 = vadd.f32 %v1567, %v1575
    %v1580 = vadd.f32 %v1568, %v1576
    %v1581 = vadd.f32 %v1569, %v1577
    %v1582 = vsel %vm58, %v1578, -inf
    %1583 = vmax.xlane.f32.xlu0 %v1582
    %v1584 = vpop.xlane.xlu0 %1583
    %v1585 = vsel %vm58, %v1579, -inf
    %1586 = vmax.xlane.f32.xlu0 %v1585
    %v1587 = vpop.xlane.xlu0 %1586
    %v1588 = vsel %vm58, %v1580, -inf
    %1589 = vmax.xlane.f32.xlu0 %v1588
    %v1590 = vpop.xlane.xlu0 %1589
    %v1591 = vsel %vm58, %v1581, -inf
    %1592 = vmax.xlane.f32.xlu0 %v1591
    %v1593 = vpop.xlane.xlu0 %1592
    %v1594 = vsub.f32 %v1578, %v1584
    %v1595 = vsub.f32 %v1579, %v1587
    %v1596 = vsub.f32 %v1580, %v1590
    %v1597 = vsub.f32 %v1581, %v1593
    %v1598 = vmul.f32 %v1594, 1.442695
    %v1599 = vpow.pop %v1598
    %v1600 = vmul.f32 %v1595, 1.442695
    %v1601 = vpow.pop %v1600
    %v1602 = vmul.f32 %v1596, 1.442695
    %v1603 = vpow.pop %v1602
    %v1604 = vmul.f32 %v1597, 1.442695
    %v1605 = vpow.pop %v1604
    %v1606 = vsel %vm58, %v1599, 0.0
    %1607 = vadd.xlane.f32.xlu0 %v1606
    %v1608 = vpop.xlane.xlu0 %1607
    %v1609 = vsel %vm58, %v1601, 0.0
    %1610 = vadd.xlane.f32.xlu0 %v1609
    %v1611 = vpop.xlane.xlu0 %1610
    %v1612 = vsel %vm58, %v1603, 0.0
    %1613 = vadd.xlane.f32.xlu0 %v1612
    %v1614 = vpop.xlane.xlu0 %1613
    %v1615 = vsel %vm58, %v1605, 0.0
    %1616 = vadd.xlane.f32.xlu0 %v1615
    %v1617 = vpop.xlane.xlu0 %1616
    %v1618 = vrcp.pop %v1608
    %v1619 = vmul.f32 %v1608, %v1618
    %v1620 = vsub.f32 1.0, %v1619
    %v1621 = vmul.f32 %v1618, %v1620
    %v1622 = vadd.f32 %v1618, %v1621
    %vm1623 = vweird.f32 %v1608
    %vm1624 = vweird.f32 %v1618
    %vm1625 = vmor %vm1623, %vm1624
    %v1626 = vsel %vm1625, %v1618, %v1622
    %v1627 = vand.u32 2147483647, %v1608
    %vm1628 = vcmp.eq.f32.partialorder %v1627, 8.507059e+37
    %v1629 = vand.u32 %v1608, 2147483648
    %v1630 = vor.u32 1.1754944e-38, %v1629
    %v1631 = vsel %vm1628, %v1630, %v1626
    %v1632 = vmul.f32 %v1599, %v1631
    %v1633 = vrcp.pop %v1611
    %v1634 = vmul.f32 %v1611, %v1633
    %v1635 = vsub.f32 1.0, %v1634
    %v1636 = vmul.f32 %v1633, %v1635
    %v1637 = vadd.f32 %v1633, %v1636
    %vm1638 = vweird.f32 %v1611
    %vm1639 = vweird.f32 %v1633
    %vm1640 = vmor %vm1638, %vm1639
    %v1641 = vsel %vm1640, %v1633, %v1637
    %v1642 = vand.u32 2147483647, %v1611
    %vm1643 = vcmp.eq.f32.partialorder %v1642, 8.507059e+37
    %v1644 = vand.u32 %v1611, 2147483648
    %v1645 = vor.u32 1.1754944e-38, %v1644
    %v1646 = vsel %vm1643, %v1645, %v1641
    %v1647 = vmul.f32 %v1601, %v1646
    %v1648 = vrcp.pop %v1614
    %v1649 = vmul.f32 %v1614, %v1648
    %v1650 = vsub.f32 1.0, %v1649
    %v1651 = vmul.f32 %v1648, %v1650
    %v1652 = vadd.f32 %v1648, %v1651
    %vm1653 = vweird.f32 %v1614
    %vm1654 = vweird.f32 %v1648
    %vm1655 = vmor %vm1653, %vm1654
    %v1656 = vsel %vm1655, %v1648, %v1652
    %v1657 = vand.u32 2147483647, %v1614
    %vm1658 = vcmp.eq.f32.partialorder %v1657, 8.507059e+37
    %v1659 = vand.u32 %v1614, 2147483648
    %v1660 = vor.u32 1.1754944e-38, %v1659
    %v1661 = vsel %vm1658, %v1660, %v1656
    %v1662 = vmul.f32 %v1603, %v1661
    %v1663 = vrcp.pop %v1617
    %v1664 = vmul.f32 %v1617, %v1663
    %v1665 = vsub.f32 1.0, %v1664
    %v1666 = vmul.f32 %v1663, %v1665
    %v1667 = vadd.f32 %v1663, %v1666
    %vm1668 = vweird.f32 %v1617
    %vm1669 = vweird.f32 %v1663
    %vm1670 = vmor %vm1668, %vm1669
    %v1671 = vsel %vm1670, %v1663, %v1667
    %v1672 = vand.u32 2147483647, %v1617
    %vm1673 = vcmp.eq.f32.partialorder %v1672, 8.507059e+37
    %v1674 = vand.u32 %v1617, 2147483648
    %v1675 = vor.u32 1.1754944e-38, %v1674
    %v1676 = vsel %vm1673, %v1675, %v1671
    %v1677 = vmul.f32 %v1605, %v1676
    %v1678 = vpack.c.bf16 %v1647, %v1632
    %v1679 = vpack.c.bf16 %v1677, %v1662
    %v1681 = vsel %vm58, %v1678, 0
    %v1684 = vsel %vm58, %v1679, 0
    %1686 = vmatpush.bf16.msra.mxu0 0
    %1687 = vmatpush.bf16.msra.mxu0 0
    %1688 = vmatpush.bf16.msra.mxu0 0
    %1689 = vmatpush.bf16.msra.mxu0 0
    %1690 = vmatpush.bf16.msra.mxu0 0
    %1691 = vmatpush.bf16.msra.mxu0 0
    %1692 = vmatpush.bf16.msra.mxu0 %v1534
    %1693 = vmatpush.bf16.msra.mxu0 %v1533
    %1694 = vmatmul.bf16.gmra.mxu0 %v1681
    %v1695 = vpop.f32.mrf.mxu0
    %v1696 = vadd.f32 0.0, %v1695
    %v1697 = vpop.f32.mrf.mxu0
    %v1698 = vadd.f32 0.0, %v1697
    %1699 = vmatmul.bf16.gmra.mxu0 %v1684
    %v1700 = vpop.f32.mrf.mxu0
    %v1701 = vadd.f32 0.0, %v1700
    %v1702 = vpop.f32.mrf.mxu0
    %v1703 = vadd.f32 0.0, %v1702
    %1704 = vdwg.mxu0
    %v1705 = vld [vmem:[#allocation2 + $0x258] sm:$0xf]
    %v1706 = vld [vmem:[#allocation2 + $0x25c] sm:$0xf]
    %v1707 = vld [vmem:[#allocation2 + $0x260] sm:$0xf]
    %v1708 = vld [vmem:[#allocation2 + $0x264] sm:$0xf]
    %v1709 = vld [vmem:[#allocation2 + $0x288] sm:$0x1]
    %v1710 = vunpack.c.l.bf16 %v1709
    %v1711 = vperm.slane %v1710, 0
    %v1716 = vunpack.c.l.b16 %v1705
    %v1717 = vunpack.c.l.b16 %v1706
    %v1718 = vunpack.c.l.b16 %v1707
    %v1719 = vunpack.c.l.b16 %v1708
    %v1720 = vpack.c.b16 %v1717, %v1716
    %v1721 = vpack.c.b16 %v1719, %v1718
    %v1725 = vsel %vm58, %v1407, 0
    %v1728 = vsel %vm58, %v1408, 0
    %1730 = vmatpush.bf16.msra.mxu0 0
    %1731 = vmatpush.bf16.msra.mxu0 0
    %1732 = vmatpush.bf16.msra.mxu0 0
    %1733 = vmatpush.bf16.msra.mxu0 0
    %1734 = vmatpush.bf16.msra.mxu0 0
    %1735 = vmatpush.bf16.msra.mxu0 0
    %1736 = vmatpush.bf16.msra.mxu0 %v1721
    %1737 = vmatpush.bf16.msra.mxu0 %v1720
    %1738 = vmatmul.bf16.gmra.mxu0 %v1725
    %v1739 = vpop.f32.mrf.mxu0
    %v1740 = vadd.f32 %v1711, %v1739
    %v1741 = vpop.f32.mrf.mxu0
    %v1742 = vadd.f32 %v1711, %v1741
    %1743 = vmatmul.bf16.gmra.mxu0 %v1728
    %v1744 = vpop.f32.mrf.mxu0
    %v1745 = vadd.f32 %v1711, %v1744
    %v1746 = vpop.f32.mrf.mxu0
    %v1747 = vadd.f32 %v1711, %v1746
    %1748 = vdwg.mxu0
    %v1749 = vpack.c.bf16 %v1742, %v1740
    %v1750 = vpack.c.bf16 %v1747, %v1745
    %v1751 = vld [vmem:[#allocation2 + $0x268] sm:$0xf]
    %v1752 = vld [vmem:[#allocation2 + $0x26c] sm:$0xf]
    %v1753 = vld [vmem:[#allocation2 + $0x270] sm:$0xf]
    %v1754 = vld [vmem:[#allocation2 + $0x274] sm:$0xf]
    %v1755 = vld [vmem:[#allocation2 + $0x290] sm:$0x1]
    %v1756 = vunpack.c.l.bf16 %v1755
    %v1757 = vperm.slane %v1756, 0
    %v1762 = vunpack.c.l.b16 %v1751
    %v1763 = vunpack.c.l.b16 %v1752
    %v1764 = vunpack.c.l.b16 %v1753
    %v1765 = vunpack.c.l.b16 %v1754
    %v1766 = vpack.c.b16 %v1763, %v1762
    %v1767 = vpack.c.b16 %v1765, %v1764
    %1770 = vmatpush.bf16.msra.mxu0 0
    %1771 = vmatpush.bf16.msra.mxu0 0
    %1772 = vmatpush.bf16.msra.mxu0 0
    %1773 = vmatpush.bf16.msra.mxu0 0
    %1774 = vmatpush.bf16.msra.mxu0 0
    %1775 = vmatpush.bf16.msra.mxu0 0
    %1776 = vmatpush.bf16.msra.mxu0 %v1767
    %1777 = vmatpush.bf16.msra.mxu0 %v1766
    %1778 = vmatmul.bf16.gmra.mxu0 %v1725
    %v1779 = vpop.f32.mrf.mxu0
    %v1780 = vadd.f32 %v1757, %v1779
    %v1781 = vpop.f32.mrf.mxu0
    %v1782 = vadd.f32 %v1757, %v1781
    %1783 = vmatmul.bf16.gmra.mxu0 %v1728
    %v1784 = vpop.f32.mrf.mxu0
    %v1785 = vadd.f32 %v1757, %v1784
    %v1786 = vpop.f32.mrf.mxu0
    %v1787 = vadd.f32 %v1757, %v1786
    %1788 = vdwg.mxu0
    %v1789 = vpack.c.bf16 %v1782, %v1780
    %v1790 = vpack.c.bf16 %v1787, %v1785
    %v1791 = vld [vmem:[#allocation2 + $0x278] sm:$0xf]
    %v1792 = vld [vmem:[#allocation2 + $0x27c] sm:$0xf]
    %v1793 = vld [vmem:[#allocation2 + $0x280] sm:$0xf]
    %v1794 = vld [vmem:[#allocation2 + $0x284] sm:$0xf]
    %v1795 = vld [vmem:[#allocation2 + $0x298] sm:$0x1]
    %v1796 = vunpack.c.l.bf16 %v1795
    %v1797 = vperm.slane %v1796, 0
    %v1802 = vunpack.c.l.b16 %v1791
    %v1803 = vunpack.c.l.b16 %v1792
    %v1804 = vunpack.c.l.b16 %v1793
    %v1805 = vunpack.c.l.b16 %v1794
    %v1806 = vpack.c.b16 %v1803, %v1802
    %v1807 = vpack.c.b16 %v1805, %v1804
    %1810 = vmatpush.bf16.msra.mxu0 0
    %1811 = vmatpush.bf16.msra.mxu0 0
    %1812 = vmatpush.bf16.msra.mxu0 0
    %1813 = vmatpush.bf16.msra.mxu0 0
    %1814 = vmatpush.bf16.msra.mxu0 0
    %1815 = vmatpush.bf16.msra.mxu0 0
    %1816 = vmatpush.bf16.msra.mxu0 %v1807
    %1817 = vmatpush.bf16.msra.mxu0 %v1806
    %1818 = vmatmul.bf16.gmra.mxu0 %v1725
    %v1819 = vpop.f32.mrf.mxu0
    %v1820 = vadd.f32 %v1797, %v1819
    %v1821 = vpop.f32.mrf.mxu0
    %v1822 = vadd.f32 %v1797, %v1821
    %1823 = vmatmul.bf16.gmra.mxu0 %v1728
    %v1824 = vpop.f32.mrf.mxu0
    %v1825 = vadd.f32 %v1797, %v1824
    %v1826 = vpop.f32.mrf.mxu0
    %v1827 = vadd.f32 %v1797, %v1826
    %1828 = vdwg.mxu0
    %v1829 = vpack.c.bf16 %v1822, %v1820
    %v1830 = vpack.c.bf16 %v1827, %v1825
    %v1832 = vsel %vm58, %v1749, 0
    %v1835 = vsel %vm58, %v1750, 0
    %v1838 = vsel %vm58, %v1789, 0
    %v1841 = vsel %vm58, %v1790, 0
    %1843 = vmatpush.bf16.xpose.msra.mxu0 0
    %1844 = vmatpush.bf16.xpose.msra.mxu0 0
    %1845 = vmatpush.bf16.xpose.msra.mxu0 0
    %1846 = vmatpush.bf16.xpose.msra.mxu0 0
    %1847 = vmatpush.bf16.xpose.msra.mxu0 0
    %1848 = vmatpush.bf16.xpose.msra.mxu0 0
    %1849 = vmatpush.bf16.xpose.msra.mxu0 %v1841
    %1850 = vmatpush.bf16.xpose.msra.mxu0 %v1838
    %1851 = vmatmul.bf16.gmra.mxu0 %v1832
    %v1852 = vpop.f32.mrf.mxu0
    %v1853 = vadd.f32 0.0, %v1852
    %v1854 = vpop.f32.mrf.mxu0
    %v1855 = vadd.f32 0.0, %v1854
    %1856 = vmatmul.bf16.gmra.mxu0 %v1835
    %v1857 = vpop.f32.mrf.mxu0
    %v1858 = vadd.f32 0.0, %v1857
    %v1859 = vpop.f32.mrf.mxu0
    %v1860 = vadd.f32 0.0, %v1859
    %1861 = vdwg.mxu0
    %v1862 = vmul.f32 %v1853, 0.17677669
    %v1863 = vmul.f32 %v1855, 0.17677669
    %v1864 = vmul.f32 %v1858, 0.17677669
    %v1865 = vmul.f32 %v1860, 0.17677669
    %v1866 = vadd.f32 %v1862, %v1574
    %v1867 = vadd.f32 %v1863, %v1575
    %v1868 = vadd.f32 %v1864, %v1576
    %v1869 = vadd.f32 %v1865, %v1577
    %v1870 = vsel %vm58, %v1866, -inf
    %1871 = vmax.xlane.f32.xlu0 %v1870
    %v1872 = vpop.xlane.xlu0 %1871
    %v1873 = vsel %vm58, %v1867, -inf
    %1874 = vmax.xlane.f32.xlu0 %v1873
    %v1875 = vpop.xlane.xlu0 %1874
    %v1876 = vsel %vm58, %v1868, -inf
    %1877 = vmax.xlane.f32.xlu0 %v1876
    %v1878 = vpop.xlane.xlu0 %1877
    %v1879 = vsel %vm58, %v1869, -inf
    %1880 = vmax.xlane.f32.xlu0 %v1879
    %v1881 = vpop.xlane.xlu0 %1880
    %v1882 = vsub.f32 %v1866, %v1872
    %v1883 = vsub.f32 %v1867, %v1875
    %v1884 = vsub.f32 %v1868, %v1878
    %v1885 = vsub.f32 %v1869, %v1881
    %v1886 = vmul.f32 %v1882, 1.442695
    %v1887 = vpow.pop %v1886
    %v1888 = vmul.f32 %v1883, 1.442695
    %v1889 = vpow.pop %v1888
    %v1890 = vmul.f32 %v1884, 1.442695
    %v1891 = vpow.pop %v1890
    %v1892 = vmul.f32 %v1885, 1.442695
    %v1893 = vpow.pop %v1892
    %v1894 = vsel %vm58, %v1887, 0.0
    %1895 = vadd.xlane.f32.xlu0 %v1894
    %v1896 = vpop.xlane.xlu0 %1895
    %v1897 = vsel %vm58, %v1889, 0.0
    %1898 = vadd.xlane.f32.xlu0 %v1897
    %v1899 = vpop.xlane.xlu0 %1898
    %v1900 = vsel %vm58, %v1891, 0.0
    %1901 = vadd.xlane.f32.xlu0 %v1900
    %v1902 = vpop.xlane.xlu0 %1901
    %v1903 = vsel %vm58, %v1893, 0.0
    %1904 = vadd.xlane.f32.xlu0 %v1903
    %v1905 = vpop.xlane.xlu0 %1904
    %v1906 = vrcp.pop %v1896
    %v1907 = vmul.f32 %v1896, %v1906
    %v1908 = vsub.f32 1.0, %v1907
    %v1909 = vmul.f32 %v1906, %v1908
    %v1910 = vadd.f32 %v1906, %v1909
    %vm1911 = vweird.f32 %v1896
    %vm1912 = vweird.f32 %v1906
    %vm1913 = vmor %vm1911, %vm1912
    %v1914 = vsel %vm1913, %v1906, %v1910
    %v1915 = vand.u32 2147483647, %v1896
    %vm1916 = vcmp.eq.f32.partialorder %v1915, 8.507059e+37
    %v1917 = vand.u32 %v1896, 2147483648
    %v1918 = vor.u32 1.1754944e-38, %v1917
    %v1919 = vsel %vm1916, %v1918, %v1914
    %v1920 = vmul.f32 %v1887, %v1919
    %v1921 = vrcp.pop %v1899
    %v1922 = vmul.f32 %v1899, %v1921
    %v1923 = vsub.f32 1.0, %v1922
    %v1924 = vmul.f32 %v1921, %v1923
    %v1925 = vadd.f32 %v1921, %v1924
    %vm1926 = vweird.f32 %v1899
    %vm1927 = vweird.f32 %v1921
    %vm1928 = vmor %vm1926, %vm1927
    %v1929 = vsel %vm1928, %v1921, %v1925
    %v1930 = vand.u32 2147483647, %v1899
    %vm1931 = vcmp.eq.f32.partialorder %v1930, 8.507059e+37
    %v1932 = vand.u32 %v1899, 2147483648
    %v1933 = vor.u32 1.1754944e-38, %v1932
    %v1934 = vsel %vm1931, %v1933, %v1929
    %v1935 = vmul.f32 %v1889, %v1934
    %v1936 = vrcp.pop %v1902
    %v1937 = vmul.f32 %v1902, %v1936
    %v1938 = vsub.f32 1.0, %v1937
    %v1939 = vmul.f32 %v1936, %v1938
    %v1940 = vadd.f32 %v1936, %v1939
    %vm1941 = vweird.f32 %v1902
    %vm1942 = vweird.f32 %v1936
    %vm1943 = vmor %vm1941, %vm1942
    %v1944 = vsel %vm1943, %v1936, %v1940
    %v1945 = vand.u32 2147483647, %v1902
    %vm1946 = vcmp.eq.f32.partialorder %v1945, 8.507059e+37
    %v1947 = vand.u32 %v1902, 2147483648
    %v1948 = vor.u32 1.1754944e-38, %v1947
    %v1949 = vsel %vm1946, %v1948, %v1944
    %v1950 = vmul.f32 %v1891, %v1949
    %v1951 = vrcp.pop %v1905
    %v1952 = vmul.f32 %v1905, %v1951
    %v1953 = vsub.f32 1.0, %v1952
    %v1954 = vmul.f32 %v1951, %v1953
    %v1955 = vadd.f32 %v1951, %v1954
    %vm1956 = vweird.f32 %v1905
    %vm1957 = vweird.f32 %v1951
    %vm1958 = vmor %vm1956, %vm1957
    %v1959 = vsel %vm1958, %v1951, %v1955
    %v1960 = vand.u32 2147483647, %v1905
    %vm1961 = vcmp.eq.f32.partialorder %v1960, 8.507059e+37
    %v1962 = vand.u32 %v1905, 2147483648
    %v1963 = vor.u32 1.1754944e-38, %v1962
    %v1964 = vsel %vm1961, %v1963, %v1959
    %v1965 = vmul.f32 %v1893, %v1964
    %v1966 = vpack.c.bf16 %v1935, %v1920
    %v1967 = vpack.c.bf16 %v1965, %v1950
    %v1969 = vsel %vm58, %v1966, 0
    %v1972 = vsel %vm58, %v1967, 0
    %1974 = vmatpush.bf16.msra.mxu0 0
    %1975 = vmatpush.bf16.msra.mxu0 0
    %1976 = vmatpush.bf16.msra.mxu0 0
    %1977 = vmatpush.bf16.msra.mxu0 0
    %1978 = vmatpush.bf16.msra.mxu0 0
    %1979 = vmatpush.bf16.msra.mxu0 0
    %1980 = vmatpush.bf16.msra.mxu0 %v1830
    %1981 = vmatpush.bf16.msra.mxu0 %v1829
    %1982 = vmatmul.bf16.gmra.mxu0 %v1969
    %v1983 = vpop.f32.mrf.mxu0
    %v1984 = vadd.f32 0.0, %v1983
    %v1985 = vpop.f32.mrf.mxu0
    %v1986 = vadd.f32 0.0, %v1985
    %1987 = vmatmul.bf16.gmra.mxu0 %v1972
    %v1988 = vpop.f32.mrf.mxu0
    %v1989 = vadd.f32 0.0, %v1988
    %v1990 = vpop.f32.mrf.mxu0
    %v1991 = vadd.f32 0.0, %v1990
    %1992 = vdwg.mxu0
    %v1993 = vpack.c.bf16 %v1696, %v1696
    %v1994 = vpack.c.bf16 %v1698, %v1698
    %v1995 = vpack.c.bf16 %v1701, %v1701
    %v1996 = vpack.c.bf16 %v1703, %v1703
    %v1997 = vpack.c.bf16 %v1984, %v1984
    %v1998 = vpack.c.bf16 %v1986, %v1986
    %v1999 = vpack.c.bf16 %v1989, %v1989
    %v2000 = vpack.c.bf16 %v1991, %v1991
    %v2005 = vunpack.c.l.b16 %v1993
    %v2006 = vunpack.c.l.b16 %v1994
    %v2007 = vunpack.c.l.b16 %v1995
    %v2008 = vunpack.c.l.b16 %v1996
    %v2009 = vpack.c.b16 %v2006, %v2005
    %v2010 = vpack.c.b16 %v2008, %v2007
    %v2015 = vunpack.c.l.b16 %v1997
    %v2016 = vunpack.c.l.b16 %v1998
    %v2017 = vunpack.c.l.b16 %v1999
    %v2018 = vunpack.c.l.b16 %v2000
    %v2019 = vpack.c.b16 %v2016, %v2015
    %v2020 = vpack.c.b16 %v2018, %v2017
    %v2021 = vld [vmem:[#allocation2 + $0x2a0] sm:$0xf]
    %v2022 = vld [vmem:[#allocation2 + $0x2a4] sm:$0xf]
    %v2023 = vld [vmem:[#allocation2 + $0x2a8] sm:$0xf]
    %v2024 = vld [vmem:[#allocation2 + $0x2ac] sm:$0xf]
    %v2025 = vld [vmem:[#allocation2 + $0x2d0] sm:$0x1]
    %v2026 = vunpack.c.l.bf16 %v2025
    %v2027 = vperm.slane %v2026, 0
    %v2032 = vunpack.c.l.b16 %v2021
    %v2033 = vunpack.c.l.b16 %v2022
    %v2034 = vunpack.c.l.b16 %v2023
    %v2035 = vunpack.c.l.b16 %v2024
    %v2036 = vpack.c.b16 %v2033, %v2032
    %v2037 = vpack.c.b16 %v2035, %v2034
    %v2041 = vsel %vm58, %v2009, 0
    %v2044 = vsel %vm58, %v2010, 0
    %v2047 = vsel %vm58, %v2019, 0
    %v2050 = vsel %vm58, %v2020, 0
    %2052 = vmatpush.bf16.msra.mxu0 0
    %2053 = vmatpush.bf16.msra.mxu0 0
    %2054 = vmatpush.bf16.msra.mxu0 0
    %2055 = vmatpush.bf16.msra.mxu0 0
    %2056 = vmatpush.bf16.msra.mxu0 0
    %2057 = vmatpush.bf16.msra.mxu0 0
    %2058 = vmatpush.bf16.msra.mxu0 %v2037
    %2059 = vmatpush.bf16.msra.mxu0 %v2036
    %2060 = vmatmul.bf16.gmra.mxu0 %v2041
    %v2061 = vpop.f32.mrf.mxu0
    %v2062 = vadd.f32 %v2027, %v2061
    %v2063 = vpop.f32.mrf.mxu0
    %v2064 = vadd.f32 %v2027, %v2063
    %2065 = vmatmul.bf16.gmra.mxu0 %v2044
    %v2066 = vpop.f32.mrf.mxu0
    %v2067 = vadd.f32 %v2027, %v2066
    %v2068 = vpop.f32.mrf.mxu0
    %v2069 = vadd.f32 %v2027, %v2068
    %2070 = vmatmul.bf16.gmra.mxu0 %v2047
    %v2071 = vpop.f32.mrf.mxu0
    %v2072 = vadd.f32 %v2027, %v2071
    %v2073 = vpop.f32.mrf.mxu0
    %v2074 = vadd.f32 %v2027, %v2073
    %2075 = vmatmul.bf16.gmra.mxu0 %v2050
    %v2076 = vpop.f32.mrf.mxu0
    %v2077 = vadd.f32 %v2027, %v2076
    %v2078 = vpop.f32.mrf.mxu0
    %v2079 = vadd.f32 %v2027, %v2078
    %2080 = vdwg.mxu0
    %v2081 = vpack.c.bf16 %v2064, %v2062
    %v2082 = vpack.c.bf16 %v2069, %v2067
    %v2083 = vpack.c.bf16 %v2074, %v2072
    %v2084 = vpack.c.bf16 %v2079, %v2077
    %v2085 = vld [vmem:[#allocation2 + $0x2b0] sm:$0xf]
    %v2086 = vld [vmem:[#allocation2 + $0x2b4] sm:$0xf]
    %v2087 = vld [vmem:[#allocation2 + $0x2b8] sm:$0xf]
    %v2088 = vld [vmem:[#allocation2 + $0x2bc] sm:$0xf]
    %v2089 = vld [vmem:[#allocation2 + $0x2d8] sm:$0x1]
    %v2090 = vunpack.c.l.bf16 %v2089
    %v2091 = vperm.slane %v2090, 0
    %v2096 = vunpack.c.l.b16 %v2085
    %v2097 = vunpack.c.l.b16 %v2086
    %v2098 = vunpack.c.l.b16 %v2087
    %v2099 = vunpack.c.l.b16 %v2088
    %v2100 = vpack.c.b16 %v2097, %v2096
    %v2101 = vpack.c.b16 %v2099, %v2098
    %2104 = vmatpush.bf16.msra.mxu0 0
    %2105 = vmatpush.bf16.msra.mxu0 0
    %2106 = vmatpush.bf16.msra.mxu0 0
    %2107 = vmatpush.bf16.msra.mxu0 0
    %2108 = vmatpush.bf16.msra.mxu0 0
    %2109 = vmatpush.bf16.msra.mxu0 0
    %2110 = vmatpush.bf16.msra.mxu0 %v2101
    %2111 = vmatpush.bf16.msra.mxu0 %v2100
    %2112 = vmatmul.bf16.gmra.mxu0 %v2041
    %v2113 = vpop.f32.mrf.mxu0
    %v2114 = vadd.f32 %v2091, %v2113
    %v2115 = vpop.f32.mrf.mxu0
    %v2116 = vadd.f32 %v2091, %v2115
    %2117 = vmatmul.bf16.gmra.mxu0 %v2044
    %v2118 = vpop.f32.mrf.mxu0
    %v2119 = vadd.f32 %v2091, %v2118
    %v2120 = vpop.f32.mrf.mxu0
    %v2121 = vadd.f32 %v2091, %v2120
    %2122 = vmatmul.bf16.gmra.mxu0 %v2047
    %v2123 = vpop.f32.mrf.mxu0
    %v2124 = vadd.f32 %v2091, %v2123
    %v2125 = vpop.f32.mrf.mxu0
    %v2126 = vadd.f32 %v2091, %v2125
    %2127 = vmatmul.bf16.gmra.mxu0 %v2050
    %v2128 = vpop.f32.mrf.mxu0
    %v2129 = vadd.f32 %v2091, %v2128
    %v2130 = vpop.f32.mrf.mxu0
    %v2131 = vadd.f32 %v2091, %v2130
    %2132 = vdwg.mxu0
    %v2133 = vpack.c.bf16 %v2116, %v2114
    %v2134 = vpack.c.bf16 %v2121, %v2119
    %v2135 = vpack.c.bf16 %v2126, %v2124
    %v2136 = vpack.c.bf16 %v2131, %v2129
    %v2137 = vld [vmem:[#allocation2 + $0x2c0] sm:$0xf]
    %v2138 = vld [vmem:[#allocation2 + $0x2c4] sm:$0xf]
    %v2139 = vld [vmem:[#allocation2 + $0x2c8] sm:$0xf]
    %v2140 = vld [vmem:[#allocation2 + $0x2cc] sm:$0xf]
    %v2141 = vld [vmem:[#allocation2 + $0x2e0] sm:$0x1]
    %v2142 = vunpack.c.l.bf16 %v2141
    %v2143 = vperm.slane %v2142, 0
    %v2148 = vunpack.c.l.b16 %v2137
    %v2149 = vunpack.c.l.b16 %v2138
    %v2150 = vunpack.c.l.b16 %v2139
    %v2151 = vunpack.c.l.b16 %v2140
    %v2152 = vpack.c.b16 %v2149, %v2148
    %v2153 = vpack.c.b16 %v2151, %v2150
    %2156 = vmatpush.bf16.msra.mxu0 0
    %2157 = vmatpush.bf16.msra.mxu0 0
    %2158 = vmatpush.bf16.msra.mxu0 0
    %2159 = vmatpush.bf16.msra.mxu0 0
    %2160 = vmatpush.bf16.msra.mxu0 0
    %2161 = vmatpush.bf16.msra.mxu0 0
    %2162 = vmatpush.bf16.msra.mxu0 %v2153
    %2163 = vmatpush.bf16.msra.mxu0 %v2152
    %2164 = vmatmul.bf16.gmra.mxu0 %v2041
    %v2165 = vpop.f32.mrf.mxu0
    %v2166 = vadd.f32 %v2143, %v2165
    %v2167 = vpop.f32.mrf.mxu0
    %v2168 = vadd.f32 %v2143, %v2167
    %2169 = vmatmul.bf16.gmra.mxu0 %v2044
    %v2170 = vpop.f32.mrf.mxu0
    %v2171 = vadd.f32 %v2143, %v2170
    %v2172 = vpop.f32.mrf.mxu0
    %v2173 = vadd.f32 %v2143, %v2172
    %2174 = vmatmul.bf16.gmra.mxu0 %v2047
    %v2175 = vpop.f32.mrf.mxu0
    %v2176 = vadd.f32 %v2143, %v2175
    %v2177 = vpop.f32.mrf.mxu0
    %v2178 = vadd.f32 %v2143, %v2177
    %2179 = vmatmul.bf16.gmra.mxu0 %v2050
    %v2180 = vpop.f32.mrf.mxu0
    %v2181 = vadd.f32 %v2143, %v2180
    %v2182 = vpop.f32.mrf.mxu0
    %v2183 = vadd.f32 %v2143, %v2182
    %2184 = vdwg.mxu0
    %v2185 = vpack.c.bf16 %v2168, %v2166
    %v2186 = vpack.c.bf16 %v2173, %v2171
    %v2187 = vpack.c.bf16 %v2178, %v2176
    %v2188 = vpack.c.bf16 %v2183, %v2181
    %v2190 = vsel %vm58, %v2081, 0
    %v2193 = vsel %vm58, %v2082, 0
    %v2196 = vsel %vm58, %v2083, 0
    %v2199 = vsel %vm58, %v2084, 0
    %v2202 = vsel %vm58, %v2133, 0
    %v2205 = vsel %vm58, %v2134, 0
    %v2208 = vsel %vm58, %v2135, 0
    %v2211 = vsel %vm58, %v2136, 0
    %2213 = vmatpush.bf16.xpose.msra.mxu0 0
    %2214 = vmatpush.bf16.xpose.msra.mxu0 0
    %2215 = vmatpush.bf16.xpose.msra.mxu0 0
    %2216 = vmatpush.bf16.xpose.msra.mxu0 0
    %2217 = vmatpush.bf16.xpose.msra.mxu0 %v2211
    %2218 = vmatpush.bf16.xpose.msra.mxu0 %v2208
    %2219 = vmatpush.bf16.xpose.msra.mxu0 %v2205
    %2220 = vmatpush.bf16.xpose.msra.mxu0 %v2202
    %2221 = vmatmul.bf16.gmra.mxu0 %v2190
    %v2222 = vpop.f32.mrf.mxu0
    %v2223 = vadd.f32 0.0, %v2222
    %v2224 = vpop.f32.mrf.mxu0
    %v2225 = vadd.f32 0.0, %v2224
    %2226 = vmatmul.bf16.gmra.mxu0 %v2193
    %v2227 = vpop.f32.mrf.mxu0
    %v2228 = vadd.f32 0.0, %v2227
    %v2229 = vpop.f32.mrf.mxu0
    %v2230 = vadd.f32 0.0, %v2229
    %2231 = vmatmul.bf16.gmra.mxu0 %v2196
    %v2232 = vpop.f32.mrf.mxu0
    %v2233 = vadd.f32 0.0, %v2232
    %v2234 = vpop.f32.mrf.mxu0
    %v2235 = vadd.f32 0.0, %v2234
    %2236 = vmatmul.bf16.gmra.mxu0 %v2199
    %v2237 = vpop.f32.mrf.mxu0
    %v2238 = vadd.f32 0.0, %v2237
    %v2239 = vpop.f32.mrf.mxu0
    %v2240 = vadd.f32 0.0, %v2239
    %2241 = vdwg.mxu0
    %v2242 = vmul.f32 %v2223, 0.17677669
    %v2243 = vmul.f32 %v2225, 0.17677669
    %v2244 = vmul.f32 %v2228, 0.17677669
    %v2245 = vmul.f32 %v2230, 0.17677669
    %v2246 = vmul.f32 %v2233, 0.17677669
    %v2247 = vmul.f32 %v2235, 0.17677669
    %v2248 = vmul.f32 %v2238, 0.17677669
    %v2249 = vmul.f32 %v2240, 0.17677669
    %v2250 = vld [vmem:[#allocation2 + $0x30] sm:$0xf]
    %v2251 = vld [vmem:[#allocation2 + $0x34] sm:$0xf]
    %v2252 = vld [vmem:[#allocation2 + $0x38] sm:$0xf]
    %v2253 = vld [vmem:[#allocation2 + $0x3c] sm:$0xf]
    %v2254 = vld [vmem:[#allocation2 + $0x40] sm:$0xf]
    %v2255 = vld [vmem:[#allocation2 + $0x44] sm:$0xf]
    %v2256 = vld [vmem:[#allocation2 + $0x48] sm:$0xf]
    %v2257 = vld [vmem:[#allocation2 + $0x4c] sm:$0xf]
    %v2258 = vunpack.c.l.bf16 %v2250
    %v2259 = vunpack.c.l.bf16 %v2251
    %v2260 = vunpack.c.l.bf16 %v2252
    %v2261 = vunpack.c.l.bf16 %v2253
    %v2262 = vunpack.c.l.bf16 %v2254
    %v2263 = vunpack.c.l.bf16 %v2255
    %v2264 = vunpack.c.l.bf16 %v2256
    %v2265 = vunpack.c.l.bf16 %v2257
    %v2266 = vadd.f32 %v2242, %v2258
    %v2267 = vadd.f32 %v2243, %v2259
    %v2268 = vadd.f32 %v2244, %v2260
    %v2269 = vadd.f32 %v2245, %v2261
    %v2270 = vadd.f32 %v2246, %v2262
    %v2271 = vadd.f32 %v2247, %v2263
    %v2272 = vadd.f32 %v2248, %v2264
    %v2273 = vadd.f32 %v2249, %v2265
    %vm2274 = vcmask 523264
    %v2275 = vsel %vm2274, %v2266, -inf
    %2276 = vmax.xlane.f32.xlu0 %v2275
    %v2277 = vpop.xlane.xlu0 %2276
    %v2278 = vsel %vm2274, %v2267, -inf
    %2279 = vmax.xlane.f32.xlu0 %v2278
    %v2280 = vpop.xlane.xlu0 %2279
    %v2281 = vsel %vm2274, %v2268, -inf
    %2282 = vmax.xlane.f32.xlu0 %v2281
    %v2283 = vpop.xlane.xlu0 %2282
    %v2284 = vsel %vm2274, %v2269, -inf
    %2285 = vmax.xlane.f32.xlu0 %v2284
    %v2286 = vpop.xlane.xlu0 %2285
    %v2287 = vsel %vm2274, %v2270, -inf
    %2288 = vmax.xlane.f32.xlu0 %v2287
    %v2289 = vpop.xlane.xlu0 %2288
    %v2290 = vsel %vm2274, %v2271, -inf
    %2291 = vmax.xlane.f32.xlu0 %v2290
    %v2292 = vpop.xlane.xlu0 %2291
    %v2293 = vsel %vm2274, %v2272, -inf
    %2294 = vmax.xlane.f32.xlu0 %v2293
    %v2295 = vpop.xlane.xlu0 %2294
    %v2296 = vsel %vm2274, %v2273, -inf
    %2297 = vmax.xlane.f32.xlu0 %v2296
    %v2298 = vpop.xlane.xlu0 %2297
    %v2299 = vsub.f32 %v2266, %v2277
    %v2300 = vsub.f32 %v2267, %v2280
    %v2301 = vsub.f32 %v2268, %v2283
    %v2302 = vsub.f32 %v2269, %v2286
    %v2303 = vsub.f32 %v2270, %v2289
    %v2304 = vsub.f32 %v2271, %v2292
    %v2305 = vsub.f32 %v2272, %v2295
    %v2306 = vsub.f32 %v2273, %v2298
    %v2307 = vmul.f32 %v2299, 1.442695
    %v2308 = vpow.pop %v2307
    %v2309 = vmul.f32 %v2300, 1.442695
    %v2310 = vpow.pop %v2309
    %v2311 = vmul.f32 %v2301, 1.442695
    %v2312 = vpow.pop %v2311
    %v2313 = vmul.f32 %v2302, 1.442695
    %v2314 = vpow.pop %v2313
    %v2315 = vmul.f32 %v2303, 1.442695
    %v2316 = vpow.pop %v2315
    %v2317 = vmul.f32 %v2304, 1.442695
    %v2318 = vpow.pop %v2317
    %v2319 = vmul.f32 %v2305, 1.442695
    %v2320 = vpow.pop %v2319
    %v2321 = vmul.f32 %v2306, 1.442695
    %v2322 = vpow.pop %v2321
    %v2323 = vsel %vm2274, %v2308, 0.0
    %2324 = vadd.xlane.f32.xlu0 %v2323
    %v2325 = vpop.xlane.xlu0 %2324
    %v2326 = vsel %vm2274, %v2310, 0.0
    %2327 = vadd.xlane.f32.xlu0 %v2326
    %v2328 = vpop.xlane.xlu0 %2327
    %v2329 = vsel %vm2274, %v2312, 0.0
    %2330 = vadd.xlane.f32.xlu0 %v2329
    %v2331 = vpop.xlane.xlu0 %2330
    %v2332 = vsel %vm2274, %v2314, 0.0
    %2333 = vadd.xlane.f32.xlu0 %v2332
    %v2334 = vpop.xlane.xlu0 %2333
    %v2335 = vsel %vm2274, %v2316, 0.0
    %2336 = vadd.xlane.f32.xlu0 %v2335
    %v2337 = vpop.xlane.xlu0 %2336
    %v2338 = vsel %vm2274, %v2318, 0.0
    %2339 = vadd.xlane.f32.xlu0 %v2338
    %v2340 = vpop.xlane.xlu0 %2339
    %v2341 = vsel %vm2274, %v2320, 0.0
    %2342 = vadd.xlane.f32.xlu0 %v2341
    %v2343 = vpop.xlane.xlu0 %2342
    %v2344 = vsel %vm2274, %v2322, 0.0
    %2345 = vadd.xlane.f32.xlu0 %v2344
    %v2346 = vpop.xlane.xlu0 %2345
    %v2347 = vrcp.pop %v2325
    %v2348 = vmul.f32 %v2325, %v2347
    %v2349 = vsub.f32 1.0, %v2348
    %v2350 = vmul.f32 %v2347, %v2349
    %v2351 = vadd.f32 %v2347, %v2350
    %vm2352 = vweird.f32 %v2325
    %vm2353 = vweird.f32 %v2347
    %vm2354 = vmor %vm2352, %vm2353
    %v2355 = vsel %vm2354, %v2347, %v2351
    %v2356 = vand.u32 2147483647, %v2325
    %vm2357 = vcmp.eq.f32.partialorder %v2356, 8.507059e+37
    %v2358 = vand.u32 %v2325, 2147483648
    %v2359 = vor.u32 1.1754944e-38, %v2358
    %v2360 = vsel %vm2357, %v2359, %v2355
    %v2361 = vmul.f32 %v2308, %v2360
    %v2362 = vrcp.pop %v2328
    %v2363 = vmul.f32 %v2328, %v2362
    %v2364 = vsub.f32 1.0, %v2363
    %v2365 = vmul.f32 %v2362, %v2364
    %v2366 = vadd.f32 %v2362, %v2365
    %vm2367 = vweird.f32 %v2328
    %vm2368 = vweird.f32 %v2362
    %vm2369 = vmor %vm2367, %vm2368
    %v2370 = vsel %vm2369, %v2362, %v2366
    %v2371 = vand.u32 2147483647, %v2328
    %vm2372 = vcmp.eq.f32.partialorder %v2371, 8.507059e+37
    %v2373 = vand.u32 %v2328, 2147483648
    %v2374 = vor.u32 1.1754944e-38, %v2373
    %v2375 = vsel %vm2372, %v2374, %v2370
    %v2376 = vmul.f32 %v2310, %v2375
    %v2377 = vrcp.pop %v2331
    %v2378 = vmul.f32 %v2331, %v2377
    %v2379 = vsub.f32 1.0, %v2378
    %v2380 = vmul.f32 %v2377, %v2379
    %v2381 = vadd.f32 %v2377, %v2380
    %vm2382 = vweird.f32 %v2331
    %vm2383 = vweird.f32 %v2377
    %vm2384 = vmor %vm2382, %vm2383
    %v2385 = vsel %vm2384, %v2377, %v2381
    %v2386 = vand.u32 2147483647, %v2331
    %vm2387 = vcmp.eq.f32.partialorder %v2386, 8.507059e+37
    %v2388 = vand.u32 %v2331, 2147483648
    %v2389 = vor.u32 1.1754944e-38, %v2388
    %v2390 = vsel %vm2387, %v2389, %v2385
    %v2391 = vmul.f32 %v2312, %v2390
    %v2392 = vrcp.pop %v2334
    %v2393 = vmul.f32 %v2334, %v2392
    %v2394 = vsub.f32 1.0, %v2393
    %v2395 = vmul.f32 %v2392, %v2394
    %v2396 = vadd.f32 %v2392, %v2395
    %vm2397 = vweird.f32 %v2334
    %vm2398 = vweird.f32 %v2392
    %vm2399 = vmor %vm2397, %vm2398
    %v2400 = vsel %vm2399, %v2392, %v2396
    %v2401 = vand.u32 2147483647, %v2334
    %vm2402 = vcmp.eq.f32.partialorder %v2401, 8.507059e+37
    %v2403 = vand.u32 %v2334, 2147483648
    %v2404 = vor.u32 1.1754944e-38, %v2403
    %v2405 = vsel %vm2402, %v2404, %v2400
    %v2406 = vmul.f32 %v2314, %v2405
    %v2407 = vrcp.pop %v2337
    %v2408 = vmul.f32 %v2337, %v2407
    %v2409 = vsub.f32 1.0, %v2408
    %v2410 = vmul.f32 %v2407, %v2409
    %v2411 = vadd.f32 %v2407, %v2410
    %vm2412 = vweird.f32 %v2337
    %vm2413 = vweird.f32 %v2407
    %vm2414 = vmor %vm2412, %vm2413
    %v2415 = vsel %vm2414, %v2407, %v2411
    %v2416 = vand.u32 2147483647, %v2337
    %vm2417 = vcmp.eq.f32.partialorder %v2416, 8.507059e+37
    %v2418 = vand.u32 %v2337, 2147483648
    %v2419 = vor.u32 1.1754944e-38, %v2418
    %v2420 = vsel %vm2417, %v2419, %v2415
    %v2421 = vmul.f32 %v2316, %v2420
    %v2422 = vrcp.pop %v2340
    %v2423 = vmul.f32 %v2340, %v2422
    %v2424 = vsub.f32 1.0, %v2423
    %v2425 = vmul.f32 %v2422, %v2424
    %v2426 = vadd.f32 %v2422, %v2425
    %vm2427 = vweird.f32 %v2340
    %vm2428 = vweird.f32 %v2422
    %vm2429 = vmor %vm2427, %vm2428
    %v2430 = vsel %vm2429, %v2422, %v2426
    %v2431 = vand.u32 2147483647, %v2340
    %vm2432 = vcmp.eq.f32.partialorder %v2431, 8.507059e+37
    %v2433 = vand.u32 %v2340, 2147483648
    %v2434 = vor.u32 1.1754944e-38, %v2433
    %v2435 = vsel %vm2432, %v2434, %v2430
    %v2436 = vmul.f32 %v2318, %v2435
    %v2437 = vrcp.pop %v2343
    %v2438 = vmul.f32 %v2343, %v2437
    %v2439 = vsub.f32 1.0, %v2438
    %v2440 = vmul.f32 %v2437, %v2439
    %v2441 = vadd.f32 %v2437, %v2440
    %vm2442 = vweird.f32 %v2343
    %vm2443 = vweird.f32 %v2437
    %vm2444 = vmor %vm2442, %vm2443
    %v2445 = vsel %vm2444, %v2437, %v2441
    %v2446 = vand.u32 2147483647, %v2343
    %vm2447 = vcmp.eq.f32.partialorder %v2446, 8.507059e+37
    %v2448 = vand.u32 %v2343, 2147483648
    %v2449 = vor.u32 1.1754944e-38, %v2448
    %v2450 = vsel %vm2447, %v2449, %v2445
    %v2451 = vmul.f32 %v2320, %v2450
    %v2452 = vrcp.pop %v2346
    %v2453 = vmul.f32 %v2346, %v2452
    %v2454 = vsub.f32 1.0, %v2453
    %v2455 = vmul.f32 %v2452, %v2454
    %v2456 = vadd.f32 %v2452, %v2455
    %vm2457 = vweird.f32 %v2346
    %vm2458 = vweird.f32 %v2452
    %vm2459 = vmor %vm2457, %vm2458
    %v2460 = vsel %vm2459, %v2452, %v2456
    %v2461 = vand.u32 2147483647, %v2346
    %vm2462 = vcmp.eq.f32.partialorder %v2461, 8.507059e+37
    %v2463 = vand.u32 %v2346, 2147483648
    %v2464 = vor.u32 1.1754944e-38, %v2463
    %v2465 = vsel %vm2462, %v2464, %v2460
    %v2466 = vmul.f32 %v2322, %v2465
    %v2467 = vpack.c.bf16 %v2376, %v2361
    %v2468 = vpack.c.bf16 %v2406, %v2391
    %v2469 = vpack.c.bf16 %v2436, %v2421
    %v2470 = vpack.c.bf16 %v2466, %v2451
    %v2472 = vsel %vm2274, %v2467, 0
    %v2475 = vsel %vm2274, %v2468, 0
    %v2478 = vsel %vm2274, %v2469, 0
    %v2481 = vsel %vm2274, %v2470, 0
    %2483 = vmatpush.bf16.msra.mxu0 0
    %2484 = vmatpush.bf16.msra.mxu0 0
    %2485 = vmatpush.bf16.msra.mxu0 0
    %2486 = vmatpush.bf16.msra.mxu0 0
    %2487 = vmatpush.bf16.msra.mxu0 %v2188
    %2488 = vmatpush.bf16.msra.mxu0 %v2187
    %2489 = vmatpush.bf16.msra.mxu0 %v2186
    %2490 = vmatpush.bf16.msra.mxu0 %v2185
    %2491 = vmatmul.bf16.gmra.mxu0 %v2472
    %v2492 = vpop.f32.mrf.mxu0
    %v2493 = vadd.f32 0.0, %v2492
    %v2494 = vpop.f32.mrf.mxu0
    %v2495 = vadd.f32 0.0, %v2494
    %2496 = vmatmul.bf16.gmra.mxu0 %v2475
    %v2497 = vpop.f32.mrf.mxu0
    %v2498 = vadd.f32 0.0, %v2497
    %v2499 = vpop.f32.mrf.mxu0
    %v2500 = vadd.f32 0.0, %v2499
    %2501 = vmatmul.bf16.gmra.mxu0 %v2478
    %v2502 = vpop.f32.mrf.mxu0
    %v2503 = vadd.f32 0.0, %v2502
    %v2504 = vpop.f32.mrf.mxu0
    %v2505 = vadd.f32 0.0, %v2504
    %2506 = vmatmul.bf16.gmra.mxu0 %v2481
    %v2507 = vpop.f32.mrf.mxu0
    %v2508 = vadd.f32 0.0, %v2507
    %v2509 = vpop.f32.mrf.mxu0
    %v2510 = vadd.f32 0.0, %v2509
    %2511 = vdwg.mxu0
    %v2512 = vpack.c.bf16 %v2495, %v2493
    %v2513 = vpack.c.bf16 %v2500, %v2498
    %v2514 = vpack.c.bf16 %v2505, %v2503
    %v2515 = vpack.c.bf16 %v2510, %v2508
    %v2516 = vld [vmem:[#allocation2 + $0x2e8] sm:$0xf]
    %v2517 = vld [vmem:[#allocation2 + $0x2ec] sm:$0xf]
    %v2518 = vld [vmem:[#allocation2 + $0x2f0] sm:$0xf]
    %v2519 = vld [vmem:[#allocation2 + $0x2f4] sm:$0xf]
    %v2520 = vld [vmem:[#allocation2 + $0x2f8] sm:$0x1]
    %v2521 = vunpack.c.l.bf16 %v2520
    %v2522 = vperm.slane %v2521, 0
    %v2527 = vunpack.c.l.b16 %v2516
    %v2528 = vunpack.c.l.b16 %v2517
    %v2529 = vunpack.c.l.b16 %v2518
    %v2530 = vunpack.c.l.b16 %v2519
    %v2531 = vpack.c.b16 %v2528, %v2527
    %v2532 = vpack.c.b16 %v2530, %v2529
    %v2536 = vsel %vm58, %v2512, 0
    %v2539 = vsel %vm58, %v2513, 0
    %v2542 = vsel %vm58, %v2514, 0
    %v2545 = vsel %vm58, %v2515, 0
    %2547 = vmatpush.bf16.msra.mxu0 0
    %2548 = vmatpush.bf16.msra.mxu0 0
    %2549 = vmatpush.bf16.msra.mxu0 0
    %2550 = vmatpush.bf16.msra.mxu0 0
    %2551 = vmatpush.bf16.msra.mxu0 0
    %2552 = vmatpush.bf16.msra.mxu0 0
    %2553 = vmatpush.bf16.msra.mxu0 %v2532
    %2554 = vmatpush.bf16.msra.mxu0 %v2531
    %2555 = vmatmul.bf16.gmra.mxu0 %v2536
    %v2556 = vpop.f32.mrf.mxu0
    %v2557 = vadd.f32 %v2522, %v2556
    %v2558 = vpop.f32.mrf.mxu0
    %v2559 = vadd.f32 %v2522, %v2558
    %2560 = vmatmul.bf16.gmra.mxu0 %v2539
    %v2561 = vpop.f32.mrf.mxu0
    %v2562 = vadd.f32 %v2522, %v2561
    %v2563 = vpop.f32.mrf.mxu0
    %v2564 = vadd.f32 %v2522, %v2563
    %2565 = vmatmul.bf16.gmra.mxu0 %v2542
    %v2566 = vpop.f32.mrf.mxu0
    %v2567 = vadd.f32 %v2522, %v2566
    %v2568 = vpop.f32.mrf.mxu0
    %v2569 = vadd.f32 %v2522, %v2568
    %2570 = vmatmul.bf16.gmra.mxu0 %v2545
    %v2571 = vpop.f32.mrf.mxu0
    %v2572 = vadd.f32 %v2522, %v2571
    %v2573 = vpop.f32.mrf.mxu0
    %v2574 = vadd.f32 %v2522, %v2573
    %2575 = vdwg.mxu0
    %v2576 = vpack.c.bf16 %v2559, %v2557
    %v2577 = vpack.c.bf16 %v2564, %v2562
    %v2578 = vpack.c.bf16 %v2569, %v2567
    %v2579 = vpack.c.bf16 %v2574, %v2572
    %v2580 = vld [vmem:[#allocation2 + $0x300] sm:$0xf]
    %v2581 = vld [vmem:[#allocation2 + $0x308] sm:$0xf]
    %v2582 = vunpack.c.l.bf16 %v2581
    %v2584 = vsel %vm2274, %v2580, 0
    %2586 = vmatpush.bf16.msra.mxu0 0
    %2587 = vmatpush.bf16.msra.mxu0 0
    %2588 = vmatpush.bf16.msra.mxu0 0
    %2589 = vmatpush.bf16.msra.mxu0 0
    %2590 = vmatpush.bf16.msra.mxu0 %v2579
    %2591 = vmatpush.bf16.msra.mxu0 %v2578
    %2592 = vmatpush.bf16.msra.mxu0 %v2577
    %2593 = vmatpush.bf16.msra.mxu0 %v2576
    %2594 = vmatmul.bf16.gmra.mxu0 %v2584
    %v2595 = vpop.f32.mrf.mxu0
    %v2596 = vadd.f32 %v2582, %v2595
    %v2597 = vpop.f32.mrf.mxu0
    %2598 = vdwg.mxu0
    %vm2599 = vcmask 7168
    %2600 = vst.msk [vmem:[%s3] sm:$0xff] %vm2599, %v2596
    // Predicated region
    $region18: #{forward.1} parent=1 // pred_check
      _
    $region19: #{forward.1} parent=1 // pred_check_branch
      %2602 = sbr.rel (0) target = $region21
    $region20: #{forward.1} parent=1 // pred_region
      _
    $region21: #{forward.1} parent=1 // pred_fallthru
      _
    // Predicated region
    $region22: #{forward.1} parent=1 // pred_check
      _
    $region23: #{forward.1} parent=1 // pred_check_branch
      %2604 = sbr.rel (0) target = $region25
    $region24: #{forward.1} parent=1 // pred_region
      _
    $region25: #{forward.1} parent=1 // pred_fallthru
      _
    %2605 = vsyncpa [#allocation3], 1

</llo_original>
